<compile_context>
chip_gen: v6e
topology: v6e:2x2x1
jax: 0.10.0
libtpu: 0.0.40
codegen_flags: <defaults>
</compile_context>

<pallas_src>
import functools

import jax
import jax.numpy as jnp
from jax.experimental import pallas as pl
from jax.experimental.pallas import tpu as pltpu


def ode_block_kernel(h_ref, w1_ref, b1_ref, w2_ref, b2_ref, o_ref):
    """One full RK4 (3/8-rule) step of the 2-layer tanh MLP ODE func on a batch tile."""
    h0 = h_ref[...].astype(jnp.float32)
    w1 = w1_ref[...]                      # (H, H), already (in, out)
    w2 = w2_ref[...]                      # (H, H)
    tm, H = h0.shape

    # Hoist the (1,H) -> (tm,H) bias broadcasts: f() is traced 4 times, and JAX
    # does not CSE broadcast_in_dim, so without this they'd be emitted 8 times.
    b1 = jnp.broadcast_to(b1_ref[...].astype(jnp.float32), (tm, H))
    b2 = jnp.broadcast_to(b2_ref[...].astype(jnp.float32), (tm, H))

    def f(h):
        z1 = jnp.tanh(jnp.dot(h, w1, preferred_element_type=jnp.float32) + b1)
        return jnp.tanh(jnp.dot(z1, w2, preferred_element_type=jnp.float32) + b2)

    one_third = jnp.float32(1.0 / 3.0)
    # dt == 1.0, folded out of every expression below.
    k1 = f(h0)
    k2 = f(h0 + k1 * one_third)
    k3 = f(h0 + (k2 - k1 * one_third))
    k4 = f(h0 + (k1 - k2 + k3))

    h1 = h0 + (k1 + 3.0 * (k2 + k3) + k4) * jnp.float32(0.125)
    o_ref[...] = h1.astype(o_ref.dtype)


def _round_up(x, m):
    return ((x + m - 1) // m) * m


@functools.partial(jax.jit, static_argnames=("block_b",))
def ode_block_forward(h0, w1_t, b1, w2_t, b2, *, block_b=128):
    """h0: (B, H). w1_t/w2_t: (H, H) already transposed to (in, out). b*: (1, H)."""
    B, H = h0.shape

    # Batch tile: as large as requested (default 128 -> full MXU row dimension),
    # sublane aligned (multiple of 8), never larger than the padded batch.
    tm = min(block_b, _round_up(B, 8))
    grid_b = pl.cdiv(B, tm)
    b_pad = grid_b * tm
    h_in = h0 if b_pad == B else jnp.pad(h0, ((0, b_pad - B), (0, 0)))

    # Advisory cost estimate so XLA schedules this custom call sensibly when it
    # sits inside a larger model.
    flops = 16 * b_pad * H * H            # 8 matmuls x 2*tm*H*H per RK4 step
    transcendentals = 8 * b_pad * H       # 8 tanh evaluations per element
    bytes_accessed = 4 * (2 * b_pad * H + 2 * H * H + 2 * H)

    out = pl.pallas_call(
        ode_block_kernel,
        out_shape=jax.ShapeDtypeStruct((b_pad, H), h0.dtype),
        grid_spec=pltpu.PrefetchScalarGridSpec(
            num_scalar_prefetch=0,
            grid=(grid_b,),
            in_specs=[
                # h0 batch tile: pipelined (double-buffered) along the grid.
                pl.BlockSpec((tm, H), lambda i: (i, 0)),
                # Weights / biases: whole-array, single-buffered, resident in
                # VMEM for the entire grid (no redundant per-step DMA).
                pl.BlockSpec(memory_space=pltpu.MemorySpace.VMEM),  # W1 (in, out)
                pl.BlockSpec(memory_space=pltpu.MemorySpace.VMEM),  # b1
                pl.BlockSpec(memory_space=pltpu.MemorySpace.VMEM),  # W2 (in, out)
                pl.BlockSpec(memory_space=pltpu.MemorySpace.VMEM),  # b2
            ],
            out_specs=pl.BlockSpec((tm, H), lambda i: (i, 0)),
        ),
        compiler_params=pltpu.CompilerParams(
            dimension_semantics=("parallel",),        # megacore-shardable on v7x
            vmem_limit_bytes=32 * 1024 * 1024,        # fits v5e/v6e/v7x scoped defaults
        ),
        cost_estimate=pl.CostEstimate(
            flops=flops,
            transcendentals=transcendentals,
            bytes_accessed=bytes_accessed,
        ),
    )(h_in, w1_t, b1, w2_t, b2)

    return out if b_pad == B else out[:B]


def ode_block_reference(h0, w1_t, b1, w2_t, b2):
    """Pure-JAX reference (same math, no Pallas)."""
    def f(h):
        z1 = jnp.tanh(h @ w1_t + b1)
        return jnp.tanh(z1 @ w2_t + b2)

    dt = 1.0
    k1 = f(h0)
    k2 = f(h0 + dt * k1 / 3.0)
    k3 = f(h0 + dt * (k2 - k1 / 3.0))
    k4 = f(h0 + dt * (k1 - k2 + k3))
    return h0 + (k1 + 3.0 * (k2 + k3) + k4) * dt * 0.125


if __name__ == "__main__":
    # hidden_size = 128 (lane aligned); B = 200 exercises both a full 128-row
    # MXU tile, a grid of length 2 (both v7x TensorCores), and the ragged-batch
    # padding path.
    B, H = 200, 128

    key = jax.random.PRNGKey(0)
    k_h, k_w1, k_b1, k_w2, k_b2 = jax.random.split(key, 5)

    # Deterministic init mirroring nn.Linear default: U(-1/sqrt(H), 1/sqrt(H)).
    bound = 1.0 / jnp.sqrt(jnp.float32(H))
    # PyTorch stores weight as (out, in); build (out, in) then transpose to (in, out).
    w1 = jax.random.uniform(k_w1, (H, H), jnp.float32, -bound, bound)
    b1 = jax.random.uniform(k_b1, (H,), jnp.float32, -bound, bound)
    w2 = jax.random.uniform(k_w2, (H, H), jnp.float32, -bound, bound)
    b2 = jax.random.uniform(k_b2, (H,), jnp.float32, -bound, bound)

    h0 = jax.random.normal(k_h, (B, H), jnp.float32)

    w1_t = w1.T                 # (in, out)
    w2_t = w2.T                 # (in, out)
    b1_r = b1.reshape(1, H)
    b2_r = b2.reshape(1, H)

    out = ode_block_forward(h0, w1_t, b1_r, w2_t, b2_r)
    out = jax.block_until_ready(out)

    ref = ode_block_reference(h0, w1_t, b1_r, w2_t, b2_r)
    assert out.shape == (B, H)
    assert jnp.allclose(out, ref, atol=1e-5, rtol=1e-5), "mismatch vs reference"

    print("KERNEL_OK")
</pallas_src>

<mosaic_0001>
module attributes {stable_mosaic.version = 11 : i64} {
  func.func @ode_block_kernel(%arg0: i32, %arg1: memref<128x128xf32, #tpu.memory_space<vmem>>, %arg2: memref<128x128xf32, #tpu.memory_space<vmem>>, %arg3: memref<1x128xf32, #tpu.memory_space<vmem>>, %arg4: memref<128x128xf32, #tpu.memory_space<vmem>>, %arg5: memref<1x128xf32, #tpu.memory_space<vmem>>, %arg6: memref<128x128xf32, #tpu.memory_space<vmem>>) attributes {dimension_semantics = [#tpu.dimension_semantics<parallel>], iteration_bounds = array<i64: 2>, scalar_prefetch = 0 : i64, scratch_operands = 0 : i64, tpu.core_type = #tpu.core_type<tc>, window_params = [{transform_indices = @transform_0, window_bounds = array<i64: 128, 128>}, {pipeline_mode = #tpu.pipeline_mode<synchronous>, transform_indices = @transform_1, window_bounds = array<i64: 128, 128>}, {pipeline_mode = #tpu.pipeline_mode<synchronous>, transform_indices = @transform_2, window_bounds = array<i64: 1, 128>}, {pipeline_mode = #tpu.pipeline_mode<synchronous>, transform_indices = @transform_3, window_bounds = array<i64: 128, 128>}, {pipeline_mode = #tpu.pipeline_mode<synchronous>, transform_indices = @transform_4, window_bounds = array<i64: 1, 128>}, {transform_indices = @transform_5, window_bounds = array<i64: 128, 128>}]} {
    %c0 = arith.constant 0 : index
    %c0_0 = arith.constant 0 : index
    %0 = vector.load %arg1[%c0, %c0_0] : memref<128x128xf32, #tpu.memory_space<vmem>>, vector<128x128xf32>
    %c0_1 = arith.constant 0 : index
    %c0_2 = arith.constant 0 : index
    %1 = vector.load %arg2[%c0_1, %c0_2] : memref<128x128xf32, #tpu.memory_space<vmem>>, vector<128x128xf32>
    %c0_3 = arith.constant 0 : index
    %c0_4 = arith.constant 0 : index
    %2 = vector.load %arg4[%c0_3, %c0_4] : memref<128x128xf32, #tpu.memory_space<vmem>>, vector<128x128xf32>
    %c0_5 = arith.constant 0 : index
    %c0_6 = arith.constant 0 : index
    %3 = vector.load %arg3[%c0_5, %c0_6] : memref<1x128xf32, #tpu.memory_space<vmem>>, vector<1x128xf32>
    %4 = vector.shape_cast %3 : vector<1x128xf32> to vector<1x128xf32>
    %5 = vector.broadcast %4 : vector<1x128xf32> to vector<128x128xf32>
    %c0_7 = arith.constant 0 : index
    %c0_8 = arith.constant 0 : index
    %6 = vector.load %arg5[%c0_7, %c0_8] : memref<1x128xf32, #tpu.memory_space<vmem>>, vector<1x128xf32>
    %7 = vector.shape_cast %6 : vector<1x128xf32> to vector<1x128xf32>
    %8 = vector.broadcast %7 : vector<1x128xf32> to vector<128x128xf32>
    %cst = arith.constant dense<0.000000e+00> : vector<128x128xf32>
    %9 = tpu.matmul %0, %1, %cst {dimension_numbers = #tpu.dot_dimension_numbers<[1], [0], [0], [1], [0, 0, 1, 1], [], []>} : vector<128x128xf32>, vector<128x128xf32>, vector<128x128xf32> -> vector<128x128xf32>
    %10 = arith.addf %9, %5 : vector<128x128xf32>
    %11 = math.tanh %10 : vector<128x128xf32>
    %cst_9 = arith.constant dense<0.000000e+00> : vector<128x128xf32>
    %12 = tpu.matmul %11, %2, %cst_9 {dimension_numbers = #tpu.dot_dimension_numbers<[1], [0], [0], [1], [0, 0, 1, 1], [], []>} : vector<128x128xf32>, vector<128x128xf32>, vector<128x128xf32> -> vector<128x128xf32>
    %13 = arith.addf %12, %8 : vector<128x128xf32>
    %14 = math.tanh %13 : vector<128x128xf32>
    %cst_10 = arith.constant 0.333333343 : f32
    %15 = vector.broadcast %cst_10 : f32 to vector<128x128xf32>
    %16 = arith.mulf %14, %15 : vector<128x128xf32>
    %17 = arith.addf %0, %16 : vector<128x128xf32>
    %cst_11 = arith.constant dense<0.000000e+00> : vector<128x128xf32>
    %18 = tpu.matmul %17, %1, %cst_11 {dimension_numbers = #tpu.dot_dimension_numbers<[1], [0], [0], [1], [0, 0, 1, 1], [], []>} : vector<128x128xf32>, vector<128x128xf32>, vector<128x128xf32> -> vector<128x128xf32>
    %19 = arith.addf %18, %5 : vector<128x128xf32>
    %20 = math.tanh %19 : vector<128x128xf32>
    %cst_12 = arith.constant dense<0.000000e+00> : vector<128x128xf32>
    %21 = tpu.matmul %20, %2, %cst_12 {dimension_numbers = #tpu.dot_dimension_numbers<[1], [0], [0], [1], [0, 0, 1, 1], [], []>} : vector<128x128xf32>, vector<128x128xf32>, vector<128x128xf32> -> vector<128x128xf32>
    %22 = arith.addf %21, %8 : vector<128x128xf32>
    %23 = math.tanh %22 : vector<128x128xf32>
    %cst_13 = arith.constant 0.333333343 : f32
    %24 = vector.broadcast %cst_13 : f32 to vector<128x128xf32>
    %25 = arith.mulf %14, %24 : vector<128x128xf32>
    %26 = arith.subf %23, %25 : vector<128x128xf32>
    %27 = arith.addf %0, %26 : vector<128x128xf32>
    %cst_14 = arith.constant dense<0.000000e+00> : vector<128x128xf32>
    %28 = tpu.matmul %27, %1, %cst_14 {dimension_numbers = #tpu.dot_dimension_numbers<[1], [0], [0], [1], [0, 0, 1, 1], [], []>} : vector<128x128xf32>, vector<128x128xf32>, vector<128x128xf32> -> vector<128x128xf32>
    %29 = arith.addf %28, %5 : vector<128x128xf32>
    %30 = math.tanh %29 : vector<128x128xf32>
    %cst_15 = arith.constant dense<0.000000e+00> : vector<128x128xf32>
    %31 = tpu.matmul %30, %2, %cst_15 {dimension_numbers = #tpu.dot_dimension_numbers<[1], [0], [0], [1], [0, 0, 1, 1], [], []>} : vector<128x128xf32>, vector<128x128xf32>, vector<128x128xf32> -> vector<128x128xf32>
    %32 = arith.addf %31, %8 : vector<128x128xf32>
    %33 = math.tanh %32 : vector<128x128xf32>
    %34 = arith.subf %14, %23 : vector<128x128xf32>
    %35 = arith.addf %34, %33 : vector<128x128xf32>
    %36 = arith.addf %0, %35 : vector<128x128xf32>
    %cst_16 = arith.constant dense<0.000000e+00> : vector<128x128xf32>
    %37 = tpu.matmul %36, %1, %cst_16 {dimension_numbers = #tpu.dot_dimension_numbers<[1], [0], [0], [1], [0, 0, 1, 1], [], []>} : vector<128x128xf32>, vector<128x128xf32>, vector<128x128xf32> -> vector<128x128xf32>
    %38 = arith.addf %37, %5 : vector<128x128xf32>
    %39 = math.tanh %38 : vector<128x128xf32>
    %cst_17 = arith.constant dense<0.000000e+00> : vector<128x128xf32>
    %40 = tpu.matmul %39, %2, %cst_17 {dimension_numbers = #tpu.dot_dimension_numbers<[1], [0], [0], [1], [0, 0, 1, 1], [], []>} : vector<128x128xf32>, vector<128x128xf32>, vector<128x128xf32> -> vector<128x128xf32>
    %41 = arith.addf %40, %8 : vector<128x128xf32>
    %42 = math.tanh %41 : vector<128x128xf32>
    %43 = arith.addf %23, %33 : vector<128x128xf32>
    %cst_18 = arith.constant 3.000000e+00 : f32
    %44 = vector.broadcast %cst_18 : f32 to vector<128x128xf32>
    %45 = arith.mulf %44, %43 : vector<128x128xf32>
    %46 = arith.addf %14, %45 : vector<128x128xf32>
    %47 = arith.addf %46, %42 : vector<128x128xf32>
    %cst_19 = arith.constant 1.250000e-01 : f32
    %48 = vector.broadcast %cst_19 : f32 to vector<128x128xf32>
    %49 = arith.mulf %47, %48 : vector<128x128xf32>
    %50 = arith.addf %0, %49 : vector<128x128xf32>
    %c0_20 = arith.constant 0 : index
    %c0_21 = arith.constant 0 : index
    %51 = vector.load %arg6[%c0_20, %c0_21] : memref<128x128xf32, #tpu.memory_space<vmem>>, vector<128x128xf32>
    tpu.vector_store %arg6[%c0_20, %c0_21], %50 {strides = array<i32>} : memref<128x128xf32, #tpu.memory_space<vmem>>, vector<128x128xf32>,
    return
  }
  func.func @transform_0(%arg0: i32) -> (i32, i32) {
    %c0_i32 = arith.constant 0 : i32
    %c0_i32_0 = arith.constant 0 : i32
    return %arg0, %c0_i32 : i32, i32
  }
  func.func @transform_1(%arg0: i32) -> (i32, i32) {
    %c0_i32 = arith.constant 0 : i32
    %c0_i32_0 = arith.constant 0 : i32
    %c0_i32_1 = arith.constant 0 : i32
    return %c0_i32, %c0_i32_0 : i32, i32
  }
  func.func @transform_2(%arg0: i32) -> (i32, i32) {
    %c0_i32 = arith.constant 0 : i32
    %c0_i32_0 = arith.constant 0 : i32
    %c0_i32_1 = arith.constant 0 : i32
    return %c0_i32, %c0_i32_0 : i32, i32
  }
  func.func @transform_3(%arg0: i32) -> (i32, i32) {
    %c0_i32 = arith.constant 0 : i32
    %c0_i32_0 = arith.constant 0 : i32
    %c0_i32_1 = arith.constant 0 : i32
    return %c0_i32, %c0_i32_0 : i32, i32
  }
  func.func @transform_4(%arg0: i32) -> (i32, i32) {
    %c0_i32 = arith.constant 0 : i32
    %c0_i32_0 = arith.constant 0 : i32
    %c0_i32_1 = arith.constant 0 : i32
    return %c0_i32, %c0_i32_0 : i32, i32
  }
  func.func @transform_5(%arg0: i32) -> (i32, i32) {
    %c0_i32 = arith.constant 0 : i32
    %c0_i32_0 = arith.constant 0 : i32
    return %arg0, %c0_i32 : i32, i32
  }
}

</mosaic_0001>

<llo_original>
// kernel: ode_block_forward.1
$region0: #{ode_block_forward.1}
  #allocation0 [shape = 'u32[]', space=smem, size = 0x4, offset = 0x4, fixed_abs, tag = 'smem constant byte address 0x4 - core index']
  #allocation1 [shape = 'u32[144,128]{1,0:T(1,128)}', space=vmem, size = 0x12000, scoped, tag = 'internal scratch']
  %s0 = inlined_call_operand.vmem [shape: f32[256,128], index: 0, kind: input, shape index: {}]
  %s1 = inlined_call_operand.vmem [shape: f32[128,128], index: 1, kind: input, shape index: {}]
  %s2 = inlined_call_operand.vmem [shape: f32[1,128], index: 2, kind: input, shape index: {}]
  %s3 = inlined_call_operand.vmem [shape: f32[128,128], index: 3, kind: input, shape index: {}]
  %s4 = inlined_call_operand.vmem [shape: f32[1,128], index: 4, kind: input, shape index: {}]
  %s5 = inlined_call_operand.vmem [shape: f32[256,128], index: 5, kind: output, shape index: {}]
  %s6 = sld [smem:[#allocation0]]
  $region53: #{ode_block_forward.1} parent=0
    _
  %s8 = ssub.s32 1, %s6
  %s9 = scalar_select 0, %s8, %s6
  loop: start=0, step=1, limit=4
  $region2: #{ode_block_forward.1} parent=0 // loop_pre_header
    _
  $region3: #{ode_block_forward.1} parent=0 // loop_header
    %s11 = sphi 0, %s15
    %p12 = scmp.ge.s32.totalorder %s11, 4
    %s21 = sphi 0, %s23
    %s24 = sphi 0, %s21
    %s25 = sphi 0, %s24
    %s41 = sphi 0, %s25
    %s45 = sphi 0, %s45
    %s47 = sphi 0, %s45
    %s48 = sphi 0, %s47
    %s62 = sphi 0, %s48
    %s66 = sphi 0, %s66
    %s68 = sphi 0, %s66
    %s69 = sphi 0, %s68
    %s83 = sphi 0, %s69
    %s87 = sphi 0, %s87
    %s89 = sphi 0, %s87
    %s90 = sphi 0, %s89
    %s104 = sphi 0, %s90
    %s108 = sphi 0, %s108
    %s110 = sphi 0, %s108
    %s111 = sphi 0, %s110
    %s125 = sphi 0, %s111
    %s131 = sphi 0, %s133
    %s134 = sphi 0, %s131
    %s135 = sphi 0, %s134
    %s151 = sphi 0, %s135
  $region4: #{ode_block_forward.1} parent=0 // loop_header_branch
    %14 = sbr.rel (%p12) target = $region8
  $region5: #{ode_block_forward.1} parent=0 // loop_body
    %s16 = ssub.s32 %s11, 1
    %s17 = ssub.s32 %s11, 2
    %s18 = sadd.s32 %s11, 1
    %s19 = ssub.s32 %s11, %s18
    %p20 = scmp.eq.s32.totalorder %s19, 0
    %s22 = sadd.s32 %s21, 1
    %s23 = scalar_select %p20, %s21, %s22
    %p26 = pneg %p20
    %p27 = scmp.eq.s32.totalorder %s11, 1
    %p28 = por %p26, %p27
    %p29 = scmp.ne.s32.totalorder %s21, %s24
    %p30 = scmp.eq.s32.totalorder %s11, 0
    %p31 = por %p29, %p30
    %p32 = scmp.ne.s32.totalorder %s21, %s24
    %p33 = scmp.eq.s32.totalorder %s16, 1
    %p34 = por %p32, %p33
    %p35 = scmp.ne.s32.totalorder %s24, %s25
    %p36 = scmp.eq.s32.totalorder %s16, 0
    %p37 = por %p35, %p36
    %p38 = scmp.ne.s32.totalorder %s24, %s25
    %p39 = scmp.eq.s32.totalorder %s17, 1
    %p40 = por %p38, %p39
    %p42 = scmp.ne.s32.totalorder %s25, %s41
    %p43 = scmp.eq.s32.totalorder %s17, 0
    %p44 = por %p42, %p43
    %s46 = sadd.s32 %s45, 1
    %p49 = scmp.eq.s32.totalorder %s11, 1
    %p50 = scmp.ne.s32.totalorder %s45, %s47
    %p51 = scmp.eq.s32.totalorder %s11, 0
    %p52 = por %p50, %p51
    %p53 = scmp.ne.s32.totalorder %s45, %s47
    %p54 = scmp.eq.s32.totalorder %s16, 1
    %p55 = por %p53, %p54
    %p56 = scmp.ne.s32.totalorder %s47, %s48
    %p57 = scmp.eq.s32.totalorder %s16, 0
    %p58 = por %p56, %p57
    %p59 = scmp.ne.s32.totalorder %s47, %s48
    %p60 = scmp.eq.s32.totalorder %s17, 1
    %p61 = por %p59, %p60
    %p63 = scmp.ne.s32.totalorder %s48, %s62
    %p64 = scmp.eq.s32.totalorder %s17, 0
    %p65 = por %p63, %p64
    %s67 = sadd.s32 %s66, 1
    %p70 = scmp.eq.s32.totalorder %s11, 1
    %p71 = scmp.ne.s32.totalorder %s66, %s68
    %p72 = scmp.eq.s32.totalorder %s11, 0
    %p73 = por %p71, %p72
    %p74 = scmp.ne.s32.totalorder %s66, %s68
    %p75 = scmp.eq.s32.totalorder %s16, 1
    %p76 = por %p74, %p75
    %p77 = scmp.ne.s32.totalorder %s68, %s69
    %p78 = scmp.eq.s32.totalorder %s16, 0
    %p79 = por %p77, %p78
    %p80 = scmp.ne.s32.totalorder %s68, %s69
    %p81 = scmp.eq.s32.totalorder %s17, 1
    %p82 = por %p80, %p81
    %p84 = scmp.ne.s32.totalorder %s69, %s83
    %p85 = scmp.eq.s32.totalorder %s17, 0
    %p86 = por %p84, %p85
    %s88 = sadd.s32 %s87, 1
    %p91 = scmp.eq.s32.totalorder %s11, 1
    %p92 = scmp.ne.s32.totalorder %s87, %s89
    %p93 = scmp.eq.s32.totalorder %s11, 0
    %p94 = por %p92, %p93
    %p95 = scmp.ne.s32.totalorder %s87, %s89
    %p96 = scmp.eq.s32.totalorder %s16, 1
    %p97 = por %p95, %p96
    %p98 = scmp.ne.s32.totalorder %s89, %s90
    %p99 = scmp.eq.s32.totalorder %s16, 0
    %p100 = por %p98, %p99
    %p101 = scmp.ne.s32.totalorder %s89, %s90
    %p102 = scmp.eq.s32.totalorder %s17, 1
    %p103 = por %p101, %p102
    %p105 = scmp.ne.s32.totalorder %s90, %s104
    %p106 = scmp.eq.s32.totalorder %s17, 0
    %p107 = por %p105, %p106
    %s109 = sadd.s32 %s108, 1
    %p112 = scmp.eq.s32.totalorder %s11, 1
    %p113 = scmp.ne.s32.totalorder %s108, %s110
    %p114 = scmp.eq.s32.totalorder %s11, 0
    %p115 = por %p113, %p114
    %p116 = scmp.ne.s32.totalorder %s108, %s110
    %p117 = scmp.eq.s32.totalorder %s16, 1
    %p118 = por %p116, %p117
    %p119 = scmp.ne.s32.totalorder %s110, %s111
    %p120 = scmp.eq.s32.totalorder %s16, 0
    %p121 = por %p119, %p120
    %p122 = scmp.ne.s32.totalorder %s110, %s111
    %p123 = scmp.eq.s32.totalorder %s17, 1
    %p124 = por %p122, %p123
    %p126 = scmp.ne.s32.totalorder %s111, %s125
    %p127 = scmp.eq.s32.totalorder %s17, 0
    %p128 = por %p126, %p127
    %s129 = ssub.s32 %s11, %s18
    %p130 = scmp.eq.s32.totalorder %s129, 0
    %s132 = sadd.s32 %s131, 1
    %s133 = scalar_select %p130, %s131, %s132
    %p136 = pneg %p130
    %p137 = scmp.eq.s32.totalorder %s11, 1
    %p138 = por %p136, %p137
    %p139 = scmp.ne.s32.totalorder %s131, %s134
    %p140 = scmp.eq.s32.totalorder %s11, 0
    %p141 = por %p139, %p140
    %p142 = scmp.ne.s32.totalorder %s131, %s134
    %p143 = scmp.eq.s32.totalorder %s16, 1
    %p144 = por %p142, %p143
    %p145 = scmp.ne.s32.totalorder %s134, %s135
    %p146 = scmp.eq.s32.totalorder %s16, 0
    %p147 = por %p145, %p146
    %p148 = scmp.ne.s32.totalorder %s134, %s135
    %p149 = scmp.eq.s32.totalorder %s17, 1
    %p150 = por %p148, %p149
    %p152 = scmp.ne.s32.totalorder %s135, %s151
    %p153 = scmp.eq.s32.totalorder %s17, 0
    %p154 = por %p152, %p153
    %p155 = scmp.le.s32.totalorder 1, %s11
    %p156 = scmp.lt.s32.totalorder %s11, 3
    %p157 = pnand %p155, %p156
    %p158 = pneg %p157
    // Predicated region
    $region9: #{ode_block_forward.1} parent=5 // pred_check
      _
    $region10: #{ode_block_forward.1} parent=5 // pred_check_branch
      %160 = sbr.rel (%p157) target = $region12
    $region11: #{ode_block_forward.1} parent=5 // pred_region
      %s161 = ssub.s32 %s11, 1
      // Predicated region
      $region13: #{ode_block_forward.1} parent=11 // pred_check
        %p162 = pneg %p58
      $region14: #{ode_block_forward.1} parent=11 // pred_check_branch
        %164 = sbr.rel (%p162) target = $region16
      $region15: #{ode_block_forward.1} parent=11 // pred_region
        _
      $region16: #{ode_block_forward.1} parent=11 // pred_fallthru
        _
      // Predicated region
      $region17: #{ode_block_forward.1} parent=11 // pred_check
        %p165 = pneg %p79
      $region18: #{ode_block_forward.1} parent=11 // pred_check_branch
        %167 = sbr.rel (%p165) target = $region20
      $region19: #{ode_block_forward.1} parent=11 // pred_region
        _
      $region20: #{ode_block_forward.1} parent=11 // pred_fallthru
        _
      // Predicated region
      $region21: #{ode_block_forward.1} parent=11 // pred_check
        %p168 = pneg %p100
      $region22: #{ode_block_forward.1} parent=11 // pred_check_branch
        %170 = sbr.rel (%p168) target = $region24
      $region23: #{ode_block_forward.1} parent=11 // pred_region
        _
      $region24: #{ode_block_forward.1} parent=11 // pred_fallthru
        _
      // Predicated region
      $region25: #{ode_block_forward.1} parent=11 // pred_check
        %p171 = pneg %p121
      $region26: #{ode_block_forward.1} parent=11 // pred_check_branch
        %173 = sbr.rel (%p171) target = $region28
      $region27: #{ode_block_forward.1} parent=11 // pred_region
        _
      $region28: #{ode_block_forward.1} parent=11 // pred_fallthru
        _
    $region12: #{ode_block_forward.1} parent=5 // pred_fallthru
      _
    %p174 = scmp.lt.s32.totalorder %s11, 2
    // Predicated region
    $region29: #{ode_block_forward.1} parent=5 // pred_check
      %p175 = pneg %p174
    $region30: #{ode_block_forward.1} parent=5 // pred_check_branch
      %177 = sbr.rel (%p175) target = $region32
    $region31: #{ode_block_forward.1} parent=5 // pred_region
      // Predicated region
      $region33: #{ode_block_forward.1} parent=31 // pred_check
        %p178 = pneg %p31
      $region34: #{ode_block_forward.1} parent=31 // pred_check_branch
        %180 = sbr.rel (%p178) target = $region36
      $region35: #{ode_block_forward.1} parent=31 // pred_region
        %s181 = smul.u32 16, %s11
        %p182 = scmp.lt.s32.totalorder %s181, 31
        %s183 = scalar_select %p182, %s181, 31
        %s184 = smul.addr %s183, 8
        %s185 = scalar_lea.vmem %s0, %s184
        %s186 = smul.u32 16, %s11
      $region36: #{ode_block_forward.1} parent=31 // pred_fallthru
        _
    $region32: #{ode_block_forward.1} parent=5 // pred_fallthru
      _
    %p187 = scmp.le.s32.totalorder 1, %s11
    %p188 = scmp.lt.s32.totalorder %s11, 3
    %p189 = pnand %p187, %p188
    %p190 = pneg %p189
    // Predicated region
    $region37: #{ode_block_forward.1} parent=5 // pred_check
      _
    $region38: #{ode_block_forward.1} parent=5 // pred_check_branch
      %192 = sbr.rel (%p189) target = $region40
    $region39: #{ode_block_forward.1} parent=5 // pred_region
      %s193 = ssub.s32 %s11, 1
      %s194 = smul.u32 16, %s16
      %p195 = scmp.lt.s32.totalorder %s194, 31
      %s196 = scalar_select %p195, %s194, 31
      %s197 = smul.addr %s196, 8
      %s198 = scalar_lea.vmem %s0, %s197
      %p199 = pneg %p37
      %p200 = pneg %p34
      %p201 = pneg %p58
      %p202 = pneg %p55
      %p203 = pneg %p79
      %p204 = pneg %p76
      %p205 = pneg %p100
      %p206 = pneg %p97
      %p207 = pneg %p121
      %p208 = pneg %p118
      %p209 = pneg %p147
      %p210 = pneg %p144
      %s211 = smul.u32 16, %s16
      %p212 = scmp.lt.s32.totalorder %s211, 31
      %s213 = scalar_select %p212, %s211, 31
      %s214 = smul.addr %s213, 8
      %s215 = scalar_lea.vmem %s5, %s214
      %s216 = smul.u32 16, %s16
      %p217 = scmp.lt.s32.totalorder %s216, 31
      %s218 = scalar_select %p217, %s216, 31
      %s219 = smul.addr %s218, 8
      %s220 = scalar_lea.vmem %s0, %s219
      %s221 = smul.u32 16, %s16
      %s222 = smul.u32 16, %s16
      %p223 = scmp.lt.s32.totalorder %s222, 31
      %s224 = scalar_select %p223, %s222, 31
      %s225 = smul.addr %s224, 8
      %s226 = scalar_lea.vmem %s5, %s225
      %s227 = smul.u32 16, %s16
      %v228 = vld [vmem:[%s220] sm:$0xff]
      %v229 = vld [vmem:[%s220 + $0x8] sm:$0xff]
      %v230 = vld [vmem:[%s220 + $0x10] sm:$0xff]
      %v231 = vld [vmem:[%s220 + $0x18] sm:$0xff]
      %v232 = vld [vmem:[%s220 + $0x20] sm:$0xff]
      %v233 = vld [vmem:[%s220 + $0x28] sm:$0xff]
      %v234 = vld [vmem:[%s220 + $0x30] sm:$0xff]
      %v235 = vld [vmem:[%s220 + $0x38] sm:$0xff]
      %v236 = vld [vmem:[%s220 + $0x40] sm:$0xff]
      %v237 = vld [vmem:[%s220 + $0x48] sm:$0xff]
      %v238 = vld [vmem:[%s220 + $0x50] sm:$0xff]
      %v239 = vld [vmem:[%s220 + $0x58] sm:$0xff]
      %v240 = vld [vmem:[%s220 + $0x60] sm:$0xff]
      %v241 = vld [vmem:[%s220 + $0x68] sm:$0xff]
      %v242 = vld [vmem:[%s220 + $0x70] sm:$0xff]
      %v243 = vld [vmem:[%s220 + $0x78] sm:$0xff]
      %v244 = vld [vmem:[%s1] sm:$0xff]
      %v245 = vld [vmem:[%s1 + $0x8] sm:$0xff]
      %v246 = vld [vmem:[%s1 + $0x10] sm:$0xff]
      %v247 = vld [vmem:[%s1 + $0x18] sm:$0xff]
      %v248 = vld [vmem:[%s1 + $0x20] sm:$0xff]
      %v249 = vld [vmem:[%s1 + $0x28] sm:$0xff]
      %v250 = vld [vmem:[%s1 + $0x30] sm:$0xff]
      %v251 = vld [vmem:[%s1 + $0x38] sm:$0xff]
      %v252 = vld [vmem:[%s1 + $0x40] sm:$0xff]
      %v253 = vld [vmem:[%s1 + $0x48] sm:$0xff]
      %v254 = vld [vmem:[%s1 + $0x50] sm:$0xff]
      %v255 = vld [vmem:[%s1 + $0x58] sm:$0xff]
      %v256 = vld [vmem:[%s1 + $0x60] sm:$0xff]
      %v257 = vld [vmem:[%s1 + $0x68] sm:$0xff]
      %v258 = vld [vmem:[%s1 + $0x70] sm:$0xff]
      %v259 = vld [vmem:[%s1 + $0x78] sm:$0xff]
      %v260 = vld [vmem:[%s3] sm:$0xff]
      %v261 = vld [vmem:[%s3 + $0x8] sm:$0xff]
      %v262 = vld [vmem:[%s3 + $0x10] sm:$0xff]
      %v263 = vld [vmem:[%s3 + $0x18] sm:$0xff]
      %v264 = vld [vmem:[%s3 + $0x20] sm:$0xff]
      %v265 = vld [vmem:[%s3 + $0x28] sm:$0xff]
      %v266 = vld [vmem:[%s3 + $0x30] sm:$0xff]
      %v267 = vld [vmem:[%s3 + $0x38] sm:$0xff]
      %v268 = vld [vmem:[%s3 + $0x40] sm:$0xff]
      %v269 = vld [vmem:[%s3 + $0x48] sm:$0xff]
      %v270 = vld [vmem:[%s3 + $0x50] sm:$0xff]
      %v271 = vld [vmem:[%s3 + $0x58] sm:$0xff]
      %v272 = vld [vmem:[%s3 + $0x60] sm:$0xff]
      %v273 = vld [vmem:[%s3 + $0x68] sm:$0xff]
      %v274 = vld [vmem:[%s3 + $0x70] sm:$0xff]
      %v275 = vld [vmem:[%s3 + $0x78] sm:$0xff]
      %v276 = vld [vmem:[%s2] sm:$0x1]
      %v278 = vlaneseq
      %v279 = vshrl.u32 %v278, 7
      %v280 = vsub.s32 0, %v279
      %v281 = vrot.slane %v276, %v280
      %v283 = vld [vmem:[%s4] sm:$0x1]
      %v285 = vlaneseq
      %v286 = vshrl.u32 %v285, 7
      %v287 = vsub.s32 0, %v286
      %v288 = vrot.slane %v283, %v287
      %290 = vmatprep.subr.mxu0 0.0
      %291 = vmatpush1.msra.mxu0 %v259
      %292 = vmatprep.subr.mxu0 0.0
      %293 = vmatpush1.msra.mxu0 %v258
      %294 = vmatprep.subr.mxu0 0.0
      %295 = vmatpush1.msra.mxu0 %v257
      %296 = vmatprep.subr.mxu0 0.0
      %297 = vmatpush1.msra.mxu0 %v256
      %298 = vmatprep.subr.mxu0 0.0
      %299 = vmatpush1.msra.mxu0 %v255
      %300 = vmatprep.subr.mxu0 0.0
      %301 = vmatpush1.msra.mxu0 %v254
      %302 = vmatprep.subr.mxu0 0.0
      %303 = vmatpush1.msra.mxu0 %v253
      %304 = vmatprep.subr.mxu0 0.0
      %305 = vmatpush1.msra.mxu0 %v252
      %306 = vmatprep.subr.mxu0 0.0
      %307 = vmatpush1.msra.mxu0 %v251
      %308 = vmatprep.subr.mxu0 0.0
      %309 = vmatpush1.msra.mxu0 %v250
      %310 = vmatprep.subr.mxu0 0.0
      %311 = vmatpush1.msra.mxu0 %v249
      %312 = vmatprep.subr.mxu0 0.0
      %313 = vmatpush1.msra.mxu0 %v248
      %314 = vmatprep.subr.mxu0 0.0
      %315 = vmatpush1.msra.mxu0 %v247
      %316 = vmatprep.subr.mxu0 0.0
      %317 = vmatpush1.msra.mxu0 %v246
      %318 = vmatprep.subr.mxu0 0.0
      %319 = vmatpush1.msra.mxu0 %v245
      %320 = vmatprep.subr.mxu0 0.0
      %321 = vmatpush1.msra.mxu0 %v244
      %322 = vmatprep.subr.mxu0 0.0
      %323 = vmatpush2.msra.mxu0 0.0
      %324 = vmatprep.subr.mxu0 0.0
      %325 = vmatpush2.msra.mxu0 0.0
      %326 = vmatprep.subr.mxu0 0.0
      %327 = vmatpush2.msra.mxu0 0.0
      %328 = vmatprep.subr.mxu0 0.0
      %329 = vmatpush2.msra.mxu0 0.0
      %330 = vmatprep.subr.mxu0 0.0
      %331 = vmatpush2.msra.mxu0 0.0
      %332 = vmatprep.subr.mxu0 0.0
      %333 = vmatpush2.msra.mxu0 0.0
      %334 = vmatprep.subr.mxu0 0.0
      %335 = vmatpush2.msra.mxu0 0.0
      %336 = vmatprep.subr.mxu0 0.0
      %337 = vmatpush2.msra.mxu0 0.0
      %338 = vmatprep.subr.mxu0 0.0
      %339 = vmatpush2.msra.mxu0 0.0
      %340 = vmatprep.subr.mxu0 0.0
      %341 = vmatpush2.msra.mxu0 0.0
      %342 = vmatprep.subr.mxu0 0.0
      %343 = vmatpush2.msra.mxu0 0.0
      %344 = vmatprep.subr.mxu0 0.0
      %345 = vmatpush2.msra.mxu0 0.0
      %346 = vmatprep.subr.mxu0 0.0
      %347 = vmatpush2.msra.mxu0 0.0
      %348 = vmatprep.subr.mxu0 0.0
      %349 = vmatpush2.msra.mxu0 0.0
      %350 = vmatprep.subr.mxu0 0.0
      %351 = vmatpush2.msra.mxu0 0.0
      %352 = vmatprep.subr.mxu0 0.0
      %353 = vmatpush2.msra.mxu0 0.0
      %354 = vmatprep.mubr.f32.mxu0 0.0
      %355 = vmatmul.mubr.f32.gmra.mxu0 %v228
      %v356 = vpop.f32.mrf.mxu0
      %v357 = vadd.f32 %v281, %v356
      %v358 = vpop.f32.mrf.mxu0
      %359 = vmatprep.mubr.f32.mxu0 0.0
      %360 = vmatmul.mubr.f32.gmra.mxu0 %v229
      %v361 = vpop.f32.mrf.mxu0
      %v362 = vadd.f32 %v281, %v361
      %v363 = vpop.f32.mrf.mxu0
      %364 = vmatprep.mubr.f32.mxu0 0.0
      %365 = vmatmul.mubr.f32.gmra.mxu0 %v230
      %v366 = vpop.f32.mrf.mxu0
      %v367 = vadd.f32 %v281, %v366
      %v368 = vpop.f32.mrf.mxu0
      %369 = vmatprep.mubr.f32.mxu0 0.0
      %370 = vmatmul.mubr.f32.gmra.mxu0 %v231
      %v371 = vpop.f32.mrf.mxu0
      %v372 = vadd.f32 %v281, %v371
      %v373 = vpop.f32.mrf.mxu0
      %374 = vmatprep.mubr.f32.mxu0 0.0
      %375 = vmatmul.mubr.f32.gmra.mxu0 %v232
      %v376 = vpop.f32.mrf.mxu0
      %v377 = vadd.f32 %v281, %v376
      %v378 = vpop.f32.mrf.mxu0
      %379 = vmatprep.mubr.f32.mxu0 0.0
      %380 = vmatmul.mubr.f32.gmra.mxu0 %v233
      %v381 = vpop.f32.mrf.mxu0
      %v382 = vadd.f32 %v281, %v381
      %v383 = vpop.f32.mrf.mxu0
      %384 = vmatprep.mubr.f32.mxu0 0.0
      %385 = vmatmul.mubr.f32.gmra.mxu0 %v234
      %v386 = vpop.f32.mrf.mxu0
      %v387 = vadd.f32 %v281, %v386
      %v388 = vpop.f32.mrf.mxu0
      %389 = vmatprep.mubr.f32.mxu0 0.0
      %390 = vmatmul.mubr.f32.gmra.mxu0 %v235
      %v391 = vpop.f32.mrf.mxu0
      %v392 = vadd.f32 %v281, %v391
      %v393 = vpop.f32.mrf.mxu0
      %394 = vmatprep.mubr.f32.mxu0 0.0
      %395 = vmatmul.mubr.f32.gmra.mxu0 %v236
      %v396 = vpop.f32.mrf.mxu0
      %v397 = vadd.f32 %v281, %v396
      %v398 = vpop.f32.mrf.mxu0
      %399 = vmatprep.mubr.f32.mxu0 0.0
      %400 = vmatmul.mubr.f32.gmra.mxu0 %v237
      %v401 = vpop.f32.mrf.mxu0
      %v402 = vadd.f32 %v281, %v401
      %v403 = vpop.f32.mrf.mxu0
      %404 = vmatprep.mubr.f32.mxu0 0.0
      %405 = vmatmul.mubr.f32.gmra.mxu0 %v238
      %v406 = vpop.f32.mrf.mxu0
      %v407 = vadd.f32 %v281, %v406
      %v408 = vpop.f32.mrf.mxu0
      %409 = vmatprep.mubr.f32.mxu0 0.0
      %410 = vmatmul.mubr.f32.gmra.mxu0 %v239
      %v411 = vpop.f32.mrf.mxu0
      %v412 = vadd.f32 %v281, %v411
      %v413 = vpop.f32.mrf.mxu0
      %414 = vmatprep.mubr.f32.mxu0 0.0
      %415 = vmatmul.mubr.f32.gmra.mxu0 %v240
      %v416 = vpop.f32.mrf.mxu0
      %v417 = vadd.f32 %v281, %v416
      %v418 = vpop.f32.mrf.mxu0
      %419 = vmatprep.mubr.f32.mxu0 0.0
      %420 = vmatmul.mubr.f32.gmra.mxu0 %v241
      %v421 = vpop.f32.mrf.mxu0
      %v422 = vadd.f32 %v281, %v421
      %v423 = vpop.f32.mrf.mxu0
      %424 = vmatprep.mubr.f32.mxu0 0.0
      %425 = vmatmul.mubr.f32.gmra.mxu0 %v242
      %v426 = vpop.f32.mrf.mxu0
      %v427 = vadd.f32 %v281, %v426
      %v428 = vpop.f32.mrf.mxu0
      %429 = vmatprep.mubr.f32.mxu0 0.0
      %430 = vmatmul.mubr.f32.gmra.mxu0 %v243
      %v431 = vpop.f32.mrf.mxu0
      %v432 = vadd.f32 %v281, %v431
      %v433 = vpop.f32.mrf.mxu0
      %434 = vdwg.mxu0
      %v435 = vtanh.pop %v357
      %v436 = vtanh.pop %v362
      %v437 = vtanh.pop %v367
      %v438 = vtanh.pop %v372
      %v439 = vtanh.pop %v377
      %v440 = vtanh.pop %v382
      %v441 = vtanh.pop %v387
      %v442 = vtanh.pop %v392
      %v443 = vtanh.pop %v397
      %v444 = vtanh.pop %v402
      %v445 = vtanh.pop %v407
      %v446 = vtanh.pop %v412
      %v447 = vtanh.pop %v417
      %v448 = vtanh.pop %v422
      %v449 = vtanh.pop %v427
      %v450 = vtanh.pop %v432
      %451 = vmatprep.subr.mxu0 0.0
      %452 = vmatpush1.msra.mxu0 %v275
      %453 = vmatprep.subr.mxu0 0.0
      %454 = vmatpush1.msra.mxu0 %v274
      %455 = vmatprep.subr.mxu0 0.0
      %456 = vmatpush1.msra.mxu0 %v273
      %457 = vmatprep.subr.mxu0 0.0
      %458 = vmatpush1.msra.mxu0 %v272
      %459 = vmatprep.subr.mxu0 0.0
      %460 = vmatpush1.msra.mxu0 %v271
      %461 = vmatprep.subr.mxu0 0.0
      %462 = vmatpush1.msra.mxu0 %v270
      %463 = vmatprep.subr.mxu0 0.0
      %464 = vmatpush1.msra.mxu0 %v269
      %465 = vmatprep.subr.mxu0 0.0
      %466 = vmatpush1.msra.mxu0 %v268
      %467 = vmatprep.subr.mxu0 0.0
      %468 = vmatpush1.msra.mxu0 %v267
      %469 = vmatprep.subr.mxu0 0.0
      %470 = vmatpush1.msra.mxu0 %v266
      %471 = vmatprep.subr.mxu0 0.0
      %472 = vmatpush1.msra.mxu0 %v265
      %473 = vmatprep.subr.mxu0 0.0
      %474 = vmatpush1.msra.mxu0 %v264
      %475 = vmatprep.subr.mxu0 0.0
      %476 = vmatpush1.msra.mxu0 %v263
      %477 = vmatprep.subr.mxu0 0.0
      %478 = vmatpush1.msra.mxu0 %v262
      %479 = vmatprep.subr.mxu0 0.0
      %480 = vmatpush1.msra.mxu0 %v261
      %481 = vmatprep.subr.mxu0 0.0
      %482 = vmatpush1.msra.mxu0 %v260
      %483 = vmatprep.subr.mxu0 0.0
      %484 = vmatpush2.msra.mxu0 0.0
      %485 = vmatprep.subr.mxu0 0.0
      %486 = vmatpush2.msra.mxu0 0.0
      %487 = vmatprep.subr.mxu0 0.0
      %488 = vmatpush2.msra.mxu0 0.0
      %489 = vmatprep.subr.mxu0 0.0
      %490 = vmatpush2.msra.mxu0 0.0
      %491 = vmatprep.subr.mxu0 0.0
      %492 = vmatpush2.msra.mxu0 0.0
      %493 = vmatprep.subr.mxu0 0.0
      %494 = vmatpush2.msra.mxu0 0.0
      %495 = vmatprep.subr.mxu0 0.0
      %496 = vmatpush2.msra.mxu0 0.0
      %497 = vmatprep.subr.mxu0 0.0
      %498 = vmatpush2.msra.mxu0 0.0
      %499 = vmatprep.subr.mxu0 0.0
      %500 = vmatpush2.msra.mxu0 0.0
      %501 = vmatprep.subr.mxu0 0.0
      %502 = vmatpush2.msra.mxu0 0.0
      %503 = vmatprep.subr.mxu0 0.0
      %504 = vmatpush2.msra.mxu0 0.0
      %505 = vmatprep.subr.mxu0 0.0
      %506 = vmatpush2.msra.mxu0 0.0
      %507 = vmatprep.subr.mxu0 0.0
      %508 = vmatpush2.msra.mxu0 0.0
      %509 = vmatprep.subr.mxu0 0.0
      %510 = vmatpush2.msra.mxu0 0.0
      %511 = vmatprep.subr.mxu0 0.0
      %512 = vmatpush2.msra.mxu0 0.0
      %513 = vmatprep.subr.mxu0 0.0
      %514 = vmatpush2.msra.mxu0 0.0
      %515 = vmatprep.mubr.f32.mxu0 0.0
      %516 = vmatmul.mubr.f32.gmra.mxu0 %v435
      %v517 = vpop.f32.mrf.mxu0
      %v518 = vadd.f32 %v288, %v517
      %v519 = vpop.f32.mrf.mxu0
      %520 = vmatprep.mubr.f32.mxu0 0.0
      %521 = vmatmul.mubr.f32.gmra.mxu0 %v436
      %v522 = vpop.f32.mrf.mxu0
      %v523 = vadd.f32 %v288, %v522
      %v524 = vpop.f32.mrf.mxu0
      %525 = vmatprep.mubr.f32.mxu0 0.0
      %526 = vmatmul.mubr.f32.gmra.mxu0 %v437
      %v527 = vpop.f32.mrf.mxu0
      %v528 = vadd.f32 %v288, %v527
      %v529 = vpop.f32.mrf.mxu0
      %530 = vmatprep.mubr.f32.mxu0 0.0
      %531 = vmatmul.mubr.f32.gmra.mxu0 %v438
      %v532 = vpop.f32.mrf.mxu0
      %v533 = vadd.f32 %v288, %v532
      %v534 = vpop.f32.mrf.mxu0
      %535 = vmatprep.mubr.f32.mxu0 0.0
      %536 = vmatmul.mubr.f32.gmra.mxu0 %v439
      %v537 = vpop.f32.mrf.mxu0
      %v538 = vadd.f32 %v288, %v537
      %v539 = vpop.f32.mrf.mxu0
      %540 = vmatprep.mubr.f32.mxu0 0.0
      %541 = vmatmul.mubr.f32.gmra.mxu0 %v440
      %v542 = vpop.f32.mrf.mxu0
      %v543 = vadd.f32 %v288, %v542
      %v544 = vpop.f32.mrf.mxu0
      %545 = vmatprep.mubr.f32.mxu0 0.0
      %546 = vmatmul.mubr.f32.gmra.mxu0 %v441
      %v547 = vpop.f32.mrf.mxu0
      %v548 = vadd.f32 %v288, %v547
      %v549 = vpop.f32.mrf.mxu0
      %550 = vmatprep.mubr.f32.mxu0 0.0
      %551 = vmatmul.mubr.f32.gmra.mxu0 %v442
      %v552 = vpop.f32.mrf.mxu0
      %v553 = vadd.f32 %v288, %v552
      %v554 = vpop.f32.mrf.mxu0
      %555 = vmatprep.mubr.f32.mxu0 0.0
      %556 = vmatmul.mubr.f32.gmra.mxu0 %v443
      %v557 = vpop.f32.mrf.mxu0
      %v558 = vadd.f32 %v288, %v557
      %v559 = vpop.f32.mrf.mxu0
      %560 = vmatprep.mubr.f32.mxu0 0.0
      %561 = vmatmul.mubr.f32.gmra.mxu0 %v444
      %v562 = vpop.f32.mrf.mxu0
      %v563 = vadd.f32 %v288, %v562
      %v564 = vpop.f32.mrf.mxu0
      %565 = vmatprep.mubr.f32.mxu0 0.0
      %566 = vmatmul.mubr.f32.gmra.mxu0 %v445
      %v567 = vpop.f32.mrf.mxu0
      %v568 = vadd.f32 %v288, %v567
      %v569 = vpop.f32.mrf.mxu0
      %570 = vmatprep.mubr.f32.mxu0 0.0
      %571 = vmatmul.mubr.f32.gmra.mxu0 %v446
      %v572 = vpop.f32.mrf.mxu0
      %v573 = vadd.f32 %v288, %v572
      %v574 = vpop.f32.mrf.mxu0
      %575 = vmatprep.mubr.f32.mxu0 0.0
      %576 = vmatmul.mubr.f32.gmra.mxu0 %v447
      %v577 = vpop.f32.mrf.mxu0
      %v578 = vadd.f32 %v288, %v577
      %v579 = vpop.f32.mrf.mxu0
      %580 = vmatprep.mubr.f32.mxu0 0.0
      %581 = vmatmul.mubr.f32.gmra.mxu0 %v448
      %v582 = vpop.f32.mrf.mxu0
      %v583 = vadd.f32 %v288, %v582
      %v584 = vpop.f32.mrf.mxu0
      %585 = vmatprep.mubr.f32.mxu0 0.0
      %586 = vmatmul.mubr.f32.gmra.mxu0 %v449
      %v587 = vpop.f32.mrf.mxu0
      %v588 = vadd.f32 %v288, %v587
      %v589 = vpop.f32.mrf.mxu0
      %590 = vmatprep.mubr.f32.mxu0 0.0
      %591 = vmatmul.mubr.f32.gmra.mxu0 %v450
      %v592 = vpop.f32.mrf.mxu0
      %v593 = vadd.f32 %v288, %v592
      %v594 = vpop.f32.mrf.mxu0
      %595 = vdwg.mxu0
      %v596 = vtanh.pop %v518
      %v597 = vtanh.pop %v523
      %v598 = vtanh.pop %v528
      %v599 = vtanh.pop %v533
      %v600 = vtanh.pop %v538
      %v601 = vtanh.pop %v543
      %v602 = vtanh.pop %v548
      %v603 = vtanh.pop %v553
      %v604 = vtanh.pop %v558
      %v605 = vtanh.pop %v563
      %v606 = vtanh.pop %v568
      %v607 = vtanh.pop %v573
      %v608 = vtanh.pop %v578
      %v609 = vtanh.pop %v583
      %v610 = vtanh.pop %v588
      %v611 = vtanh.pop %v593
      %v612 = vmul.f32 %v596, 0.33333334
      %v613 = vmul.f32 %v597, 0.33333334
      %v614 = vmul.f32 %v598, 0.33333334
      %v615 = vmul.f32 %v599, 0.33333334
      %v616 = vmul.f32 %v600, 0.33333334
      %v617 = vmul.f32 %v601, 0.33333334
      %v618 = vmul.f32 %v602, 0.33333334
      %v619 = vmul.f32 %v603, 0.33333334
      %v620 = vmul.f32 %v604, 0.33333334
      %v621 = vmul.f32 %v605, 0.33333334
      %v622 = vmul.f32 %v606, 0.33333334
      %v623 = vmul.f32 %v607, 0.33333334
      %v624 = vmul.f32 %v608, 0.33333334
      %v625 = vmul.f32 %v609, 0.33333334
      %v626 = vmul.f32 %v610, 0.33333334
      %v627 = vmul.f32 %v611, 0.33333334
      %v628 = vadd.f32 %v228, %v612
      %v629 = vadd.f32 %v229, %v613
      %v630 = vadd.f32 %v230, %v614
      %v631 = vadd.f32 %v231, %v615
      %v632 = vadd.f32 %v232, %v616
      %v633 = vadd.f32 %v233, %v617
      %v634 = vadd.f32 %v234, %v618
      %v635 = vadd.f32 %v235, %v619
      %v636 = vadd.f32 %v236, %v620
      %v637 = vadd.f32 %v237, %v621
      %v638 = vadd.f32 %v238, %v622
      %v639 = vadd.f32 %v239, %v623
      %v640 = vadd.f32 %v240, %v624
      %v641 = vadd.f32 %v241, %v625
      %v642 = vadd.f32 %v242, %v626
      %v643 = vadd.f32 %v243, %v627
      %644 = vmatprep.subr.mxu0 0.0
      %645 = vmatpush1.msra.mxu0 %v259
      %646 = vmatprep.subr.mxu0 0.0
      %647 = vmatpush1.msra.mxu0 %v258
      %648 = vmatprep.subr.mxu0 0.0
      %649 = vmatpush1.msra.mxu0 %v257
      %650 = vmatprep.subr.mxu0 0.0
      %651 = vmatpush1.msra.mxu0 %v256
      %652 = vmatprep.subr.mxu0 0.0
      %653 = vmatpush1.msra.mxu0 %v255
      %654 = vmatprep.subr.mxu0 0.0
      %655 = vmatpush1.msra.mxu0 %v254
      %656 = vmatprep.subr.mxu0 0.0
      %657 = vmatpush1.msra.mxu0 %v253
      %658 = vmatprep.subr.mxu0 0.0
      %659 = vmatpush1.msra.mxu0 %v252
      %660 = vmatprep.subr.mxu0 0.0
      %661 = vmatpush1.msra.mxu0 %v251
      %662 = vmatprep.subr.mxu0 0.0
      %663 = vmatpush1.msra.mxu0 %v250
      %664 = vmatprep.subr.mxu0 0.0
      %665 = vmatpush1.msra.mxu0 %v249
      %666 = vmatprep.subr.mxu0 0.0
      %667 = vmatpush1.msra.mxu0 %v248
      %668 = vmatprep.subr.mxu0 0.0
      %669 = vmatpush1.msra.mxu0 %v247
      %670 = vmatprep.subr.mxu0 0.0
      %671 = vmatpush1.msra.mxu0 %v246
      %672 = vmatprep.subr.mxu0 0.0
      %673 = vmatpush1.msra.mxu0 %v245
      %674 = vmatprep.subr.mxu0 0.0
      %675 = vmatpush1.msra.mxu0 %v244
      %676 = vmatprep.subr.mxu0 0.0
      %677 = vmatpush2.msra.mxu0 0.0
      %678 = vmatprep.subr.mxu0 0.0
      %679 = vmatpush2.msra.mxu0 0.0
      %680 = vmatprep.subr.mxu0 0.0
      %681 = vmatpush2.msra.mxu0 0.0
      %682 = vmatprep.subr.mxu0 0.0
      %683 = vmatpush2.msra.mxu0 0.0
      %684 = vmatprep.subr.mxu0 0.0
      %685 = vmatpush2.msra.mxu0 0.0
      %686 = vmatprep.subr.mxu0 0.0
      %687 = vmatpush2.msra.mxu0 0.0
      %688 = vmatprep.subr.mxu0 0.0
      %689 = vmatpush2.msra.mxu0 0.0
      %690 = vmatprep.subr.mxu0 0.0
      %691 = vmatpush2.msra.mxu0 0.0
      %692 = vmatprep.subr.mxu0 0.0
      %693 = vmatpush2.msra.mxu0 0.0
      %694 = vmatprep.subr.mxu0 0.0
      %695 = vmatpush2.msra.mxu0 0.0
      %696 = vmatprep.subr.mxu0 0.0
      %697 = vmatpush2.msra.mxu0 0.0
      %698 = vmatprep.subr.mxu0 0.0
      %699 = vmatpush2.msra.mxu0 0.0
      %700 = vmatprep.subr.mxu0 0.0
      %701 = vmatpush2.msra.mxu0 0.0
      %702 = vmatprep.subr.mxu0 0.0
      %703 = vmatpush2.msra.mxu0 0.0
      %704 = vmatprep.subr.mxu0 0.0
      %705 = vmatpush2.msra.mxu0 0.0
      %706 = vmatprep.subr.mxu0 0.0
      %707 = vmatpush2.msra.mxu0 0.0
      %708 = vmatprep.mubr.f32.mxu0 0.0
      %709 = vmatmul.mubr.f32.gmra.mxu0 %v628
      %v710 = vpop.f32.mrf.mxu0
      %v711 = vadd.f32 %v281, %v710
      %v712 = vpop.f32.mrf.mxu0
      %713 = vmatprep.mubr.f32.mxu0 0.0
      %714 = vmatmul.mubr.f32.gmra.mxu0 %v629
      %v715 = vpop.f32.mrf.mxu0
      %v716 = vadd.f32 %v281, %v715
      %v717 = vpop.f32.mrf.mxu0
      %718 = vmatprep.mubr.f32.mxu0 0.0
      %719 = vmatmul.mubr.f32.gmra.mxu0 %v630
      %v720 = vpop.f32.mrf.mxu0
      %v721 = vadd.f32 %v281, %v720
      %v722 = vpop.f32.mrf.mxu0
      %723 = vmatprep.mubr.f32.mxu0 0.0
      %724 = vmatmul.mubr.f32.gmra.mxu0 %v631
      %v725 = vpop.f32.mrf.mxu0
      %v726 = vadd.f32 %v281, %v725
      %v727 = vpop.f32.mrf.mxu0
      %728 = vmatprep.mubr.f32.mxu0 0.0
      %729 = vmatmul.mubr.f32.gmra.mxu0 %v632
      %v730 = vpop.f32.mrf.mxu0
      %v731 = vadd.f32 %v281, %v730
      %v732 = vpop.f32.mrf.mxu0
      %733 = vmatprep.mubr.f32.mxu0 0.0
      %734 = vmatmul.mubr.f32.gmra.mxu0 %v633
      %v735 = vpop.f32.mrf.mxu0
      %v736 = vadd.f32 %v281, %v735
      %v737 = vpop.f32.mrf.mxu0
      %738 = vmatprep.mubr.f32.mxu0 0.0
      %739 = vmatmul.mubr.f32.gmra.mxu0 %v634
      %v740 = vpop.f32.mrf.mxu0
      %v741 = vadd.f32 %v281, %v740
      %v742 = vpop.f32.mrf.mxu0
      %743 = vmatprep.mubr.f32.mxu0 0.0
      %744 = vmatmul.mubr.f32.gmra.mxu0 %v635
      %v745 = vpop.f32.mrf.mxu0
      %v746 = vadd.f32 %v281, %v745
      %v747 = vpop.f32.mrf.mxu0
      %748 = vmatprep.mubr.f32.mxu0 0.0
      %749 = vmatmul.mubr.f32.gmra.mxu0 %v636
      %v750 = vpop.f32.mrf.mxu0
      %v751 = vadd.f32 %v281, %v750
      %v752 = vpop.f32.mrf.mxu0
      %753 = vmatprep.mubr.f32.mxu0 0.0
      %754 = vmatmul.mubr.f32.gmra.mxu0 %v637
      %v755 = vpop.f32.mrf.mxu0
      %v756 = vadd.f32 %v281, %v755
      %v757 = vpop.f32.mrf.mxu0
      %758 = vmatprep.mubr.f32.mxu0 0.0
      %759 = vmatmul.mubr.f32.gmra.mxu0 %v638
      %v760 = vpop.f32.mrf.mxu0
      %v761 = vadd.f32 %v281, %v760
      %v762 = vpop.f32.mrf.mxu0
      %763 = vmatprep.mubr.f32.mxu0 0.0
      %764 = vmatmul.mubr.f32.gmra.mxu0 %v639
      %v765 = vpop.f32.mrf.mxu0
      %v766 = vadd.f32 %v281, %v765
      %v767 = vpop.f32.mrf.mxu0
      %768 = vmatprep.mubr.f32.mxu0 0.0
      %769 = vmatmul.mubr.f32.gmra.mxu0 %v640
      %v770 = vpop.f32.mrf.mxu0
      %v771 = vadd.f32 %v281, %v770
      %v772 = vpop.f32.mrf.mxu0
      %773 = vmatprep.mubr.f32.mxu0 0.0
      %774 = vmatmul.mubr.f32.gmra.mxu0 %v641
      %v775 = vpop.f32.mrf.mxu0
      %v776 = vadd.f32 %v281, %v775
      %v777 = vpop.f32.mrf.mxu0
      %778 = vmatprep.mubr.f32.mxu0 0.0
      %779 = vmatmul.mubr.f32.gmra.mxu0 %v642
      %v780 = vpop.f32.mrf.mxu0
      %v781 = vadd.f32 %v281, %v780
      %v782 = vpop.f32.mrf.mxu0
      %783 = vmatprep.mubr.f32.mxu0 0.0
      %784 = vmatmul.mubr.f32.gmra.mxu0 %v643
      %v785 = vpop.f32.mrf.mxu0
      %v786 = vadd.f32 %v281, %v785
      %v787 = vpop.f32.mrf.mxu0
      %788 = vdwg.mxu0
      %v789 = vtanh.pop %v711
      %v790 = vtanh.pop %v716
      %v791 = vtanh.pop %v721
      %v792 = vtanh.pop %v726
      %v793 = vtanh.pop %v731
      %v794 = vtanh.pop %v736
      %v795 = vtanh.pop %v741
      %v796 = vtanh.pop %v746
      %v797 = vtanh.pop %v751
      %v798 = vtanh.pop %v756
      %v799 = vtanh.pop %v761
      %v800 = vtanh.pop %v766
      %v801 = vtanh.pop %v771
      %v802 = vtanh.pop %v776
      %v803 = vtanh.pop %v781
      %v804 = vtanh.pop %v786
      %805 = vmatprep.subr.mxu0 0.0
      %806 = vmatpush1.msra.mxu0 %v275
      %807 = vmatprep.subr.mxu0 0.0
      %808 = vmatpush1.msra.mxu0 %v274
      %809 = vmatprep.subr.mxu0 0.0
      %810 = vmatpush1.msra.mxu0 %v273
      %811 = vmatprep.subr.mxu0 0.0
      %812 = vmatpush1.msra.mxu0 %v272
      %813 = vmatprep.subr.mxu0 0.0
      %814 = vmatpush1.msra.mxu0 %v271
      %815 = vmatprep.subr.mxu0 0.0
      %816 = vmatpush1.msra.mxu0 %v270
      %817 = vmatprep.subr.mxu0 0.0
      %818 = vmatpush1.msra.mxu0 %v269
      %819 = vmatprep.subr.mxu0 0.0
      %820 = vmatpush1.msra.mxu0 %v268
      %821 = vmatprep.subr.mxu0 0.0
      %822 = vmatpush1.msra.mxu0 %v267
      %823 = vmatprep.subr.mxu0 0.0
      %824 = vmatpush1.msra.mxu0 %v266
      %825 = vmatprep.subr.mxu0 0.0
      %826 = vmatpush1.msra.mxu0 %v265
      %827 = vmatprep.subr.mxu0 0.0
      %828 = vmatpush1.msra.mxu0 %v264
      %829 = vmatprep.subr.mxu0 0.0
      %830 = vmatpush1.msra.mxu0 %v263
      %831 = vmatprep.subr.mxu0 0.0
      %832 = vmatpush1.msra.mxu0 %v262
      %833 = vmatprep.subr.mxu0 0.0
      %834 = vmatpush1.msra.mxu0 %v261
      %835 = vmatprep.subr.mxu0 0.0
      %836 = vmatpush1.msra.mxu0 %v260
      %837 = vmatprep.subr.mxu0 0.0
      %838 = vmatpush2.msra.mxu0 0.0
      %839 = vmatprep.subr.mxu0 0.0
      %840 = vmatpush2.msra.mxu0 0.0
      %841 = vmatprep.subr.mxu0 0.0
      %842 = vmatpush2.msra.mxu0 0.0
      %843 = vmatprep.subr.mxu0 0.0
      %844 = vmatpush2.msra.mxu0 0.0
      %845 = vmatprep.subr.mxu0 0.0
      %846 = vmatpush2.msra.mxu0 0.0
      %847 = vmatprep.subr.mxu0 0.0
      %848 = vmatpush2.msra.mxu0 0.0
      %849 = vmatprep.subr.mxu0 0.0
      %850 = vmatpush2.msra.mxu0 0.0
      %851 = vmatprep.subr.mxu0 0.0
      %852 = vmatpush2.msra.mxu0 0.0
      %853 = vmatprep.subr.mxu0 0.0
      %854 = vmatpush2.msra.mxu0 0.0
      %855 = vmatprep.subr.mxu0 0.0
      %856 = vmatpush2.msra.mxu0 0.0
      %857 = vmatprep.subr.mxu0 0.0
      %858 = vmatpush2.msra.mxu0 0.0
      %859 = vmatprep.subr.mxu0 0.0
      %860 = vmatpush2.msra.mxu0 0.0
      %861 = vmatprep.subr.mxu0 0.0
      %862 = vmatpush2.msra.mxu0 0.0
      %863 = vmatprep.subr.mxu0 0.0
      %864 = vmatpush2.msra.mxu0 0.0
      %865 = vmatprep.subr.mxu0 0.0
      %866 = vmatpush2.msra.mxu0 0.0
      %867 = vmatprep.subr.mxu0 0.0
      %868 = vmatpush2.msra.mxu0 0.0
      %869 = vmatprep.mubr.f32.mxu0 0.0
      %870 = vmatmul.mubr.f32.gmra.mxu0 %v789
      %v871 = vpop.f32.mrf.mxu0
      %v872 = vadd.f32 %v288, %v871
      %v873 = vpop.f32.mrf.mxu0
      %874 = vmatprep.mubr.f32.mxu0 0.0
      %875 = vmatmul.mubr.f32.gmra.mxu0 %v790
      %v876 = vpop.f32.mrf.mxu0
      %v877 = vadd.f32 %v288, %v876
      %v878 = vpop.f32.mrf.mxu0
      %879 = vmatprep.mubr.f32.mxu0 0.0
      %880 = vmatmul.mubr.f32.gmra.mxu0 %v791
      %v881 = vpop.f32.mrf.mxu0
      %v882 = vadd.f32 %v288, %v881
      %v883 = vpop.f32.mrf.mxu0
      %884 = vmatprep.mubr.f32.mxu0 0.0
      %885 = vmatmul.mubr.f32.gmra.mxu0 %v792
      %v886 = vpop.f32.mrf.mxu0
      %v887 = vadd.f32 %v288, %v886
      %v888 = vpop.f32.mrf.mxu0
      %889 = vmatprep.mubr.f32.mxu0 0.0
      %890 = vmatmul.mubr.f32.gmra.mxu0 %v793
      %v891 = vpop.f32.mrf.mxu0
      %v892 = vadd.f32 %v288, %v891
      %v893 = vpop.f32.mrf.mxu0
      %894 = vmatprep.mubr.f32.mxu0 0.0
      %895 = vmatmul.mubr.f32.gmra.mxu0 %v794
      %v896 = vpop.f32.mrf.mxu0
      %v897 = vadd.f32 %v288, %v896
      %v898 = vpop.f32.mrf.mxu0
      %899 = vmatprep.mubr.f32.mxu0 0.0
      %900 = vmatmul.mubr.f32.gmra.mxu0 %v795
      %v901 = vpop.f32.mrf.mxu0
      %v902 = vadd.f32 %v288, %v901
      %v903 = vpop.f32.mrf.mxu0
      %904 = vmatprep.mubr.f32.mxu0 0.0
      %905 = vmatmul.mubr.f32.gmra.mxu0 %v796
      %v906 = vpop.f32.mrf.mxu0
      %v907 = vadd.f32 %v288, %v906
      %v908 = vpop.f32.mrf.mxu0
      %909 = vmatprep.mubr.f32.mxu0 0.0
      %910 = vmatmul.mubr.f32.gmra.mxu0 %v797
      %v911 = vpop.f32.mrf.mxu0
      %v912 = vadd.f32 %v288, %v911
      %v913 = vpop.f32.mrf.mxu0
      %914 = vmatprep.mubr.f32.mxu0 0.0
      %915 = vmatmul.mubr.f32.gmra.mxu0 %v798
      %v916 = vpop.f32.mrf.mxu0
      %v917 = vadd.f32 %v288, %v916
      %v918 = vpop.f32.mrf.mxu0
      %919 = vmatprep.mubr.f32.mxu0 0.0
      %920 = vmatmul.mubr.f32.gmra.mxu0 %v799
      %v921 = vpop.f32.mrf.mxu0
      %v922 = vadd.f32 %v288, %v921
      %v923 = vpop.f32.mrf.mxu0
      %924 = vmatprep.mubr.f32.mxu0 0.0
      %925 = vmatmul.mubr.f32.gmra.mxu0 %v800
      %v926 = vpop.f32.mrf.mxu0
      %v927 = vadd.f32 %v288, %v926
      %v928 = vpop.f32.mrf.mxu0
      %929 = vmatprep.mubr.f32.mxu0 0.0
      %930 = vmatmul.mubr.f32.gmra.mxu0 %v801
      %v931 = vpop.f32.mrf.mxu0
      %v932 = vadd.f32 %v288, %v931
      %v933 = vpop.f32.mrf.mxu0
      %934 = vmatprep.mubr.f32.mxu0 0.0
      %935 = vmatmul.mubr.f32.gmra.mxu0 %v802
      %v936 = vpop.f32.mrf.mxu0
      %v937 = vadd.f32 %v288, %v936
      %v938 = vpop.f32.mrf.mxu0
      %939 = vmatprep.mubr.f32.mxu0 0.0
      %940 = vmatmul.mubr.f32.gmra.mxu0 %v803
      %v941 = vpop.f32.mrf.mxu0
      %v942 = vadd.f32 %v288, %v941
      %v943 = vpop.f32.mrf.mxu0
      %944 = vmatprep.mubr.f32.mxu0 0.0
      %945 = vmatmul.mubr.f32.gmra.mxu0 %v804
      %v946 = vpop.f32.mrf.mxu0
      %v947 = vadd.f32 %v288, %v946
      %v948 = vpop.f32.mrf.mxu0
      %949 = vdwg.mxu0
      %v950 = vtanh.pop %v872
      %v951 = vtanh.pop %v877
      %v952 = vtanh.pop %v882
      %v953 = vtanh.pop %v887
      %v954 = vtanh.pop %v892
      %v955 = vtanh.pop %v897
      %v956 = vtanh.pop %v902
      %v957 = vtanh.pop %v907
      %v958 = vtanh.pop %v912
      %v959 = vtanh.pop %v917
      %v960 = vtanh.pop %v922
      %v961 = vtanh.pop %v927
      %v962 = vtanh.pop %v932
      %v963 = vtanh.pop %v937
      %v964 = vtanh.pop %v942
      %v965 = vtanh.pop %v947
      %v966 = vsub.f32 %v950, %v612
      %v967 = vsub.f32 %v951, %v613
      %v968 = vsub.f32 %v952, %v614
      %v969 = vsub.f32 %v953, %v615
      %v970 = vsub.f32 %v954, %v616
      %v971 = vsub.f32 %v955, %v617
      %v972 = vsub.f32 %v956, %v618
      %v973 = vsub.f32 %v957, %v619
      %v974 = vsub.f32 %v958, %v620
      %v975 = vsub.f32 %v959, %v621
      %v976 = vsub.f32 %v960, %v622
      %v977 = vsub.f32 %v961, %v623
      %v978 = vsub.f32 %v962, %v624
      %v979 = vsub.f32 %v963, %v625
      %v980 = vsub.f32 %v964, %v626
      %v981 = vsub.f32 %v965, %v627
      %v982 = vadd.f32 %v228, %v966
      %v983 = vadd.f32 %v229, %v967
      %v984 = vadd.f32 %v230, %v968
      %v985 = vadd.f32 %v231, %v969
      %v986 = vadd.f32 %v232, %v970
      %v987 = vadd.f32 %v233, %v971
      %v988 = vadd.f32 %v234, %v972
      %v989 = vadd.f32 %v235, %v973
      %v990 = vadd.f32 %v236, %v974
      %v991 = vadd.f32 %v237, %v975
      %v992 = vadd.f32 %v238, %v976
      %v993 = vadd.f32 %v239, %v977
      %v994 = vadd.f32 %v240, %v978
      %v995 = vadd.f32 %v241, %v979
      %v996 = vadd.f32 %v242, %v980
      %v997 = vadd.f32 %v243, %v981
      %998 = vmatprep.subr.mxu0 0.0
      %999 = vmatpush1.msra.mxu0 %v259
      %1000 = vmatprep.subr.mxu0 0.0
      %1001 = vmatpush1.msra.mxu0 %v258
      %1002 = vmatprep.subr.mxu0 0.0
      %1003 = vmatpush1.msra.mxu0 %v257
      %1004 = vmatprep.subr.mxu0 0.0
      %1005 = vmatpush1.msra.mxu0 %v256
      %1006 = vmatprep.subr.mxu0 0.0
      %1007 = vmatpush1.msra.mxu0 %v255
      %1008 = vmatprep.subr.mxu0 0.0
      %1009 = vmatpush1.msra.mxu0 %v254
      %1010 = vmatprep.subr.mxu0 0.0
      %1011 = vmatpush1.msra.mxu0 %v253
      %1012 = vmatprep.subr.mxu0 0.0
      %1013 = vmatpush1.msra.mxu0 %v252
      %1014 = vmatprep.subr.mxu0 0.0
      %1015 = vmatpush1.msra.mxu0 %v251
      %1016 = vmatprep.subr.mxu0 0.0
      %1017 = vmatpush1.msra.mxu0 %v250
      %1018 = vmatprep.subr.mxu0 0.0
      %1019 = vmatpush1.msra.mxu0 %v249
      %1020 = vmatprep.subr.mxu0 0.0
      %1021 = vmatpush1.msra.mxu0 %v248
      %1022 = vmatprep.subr.mxu0 0.0
      %1023 = vmatpush1.msra.mxu0 %v247
      %1024 = vmatprep.subr.mxu0 0.0
      %1025 = vmatpush1.msra.mxu0 %v246
      %1026 = vmatprep.subr.mxu0 0.0
      %1027 = vmatpush1.msra.mxu0 %v245
      %1028 = vmatprep.subr.mxu0 0.0
      %1029 = vmatpush1.msra.mxu0 %v244
      %1030 = vmatprep.subr.mxu0 0.0
      %1031 = vmatpush2.msra.mxu0 0.0
      %1032 = vmatprep.subr.mxu0 0.0
      %1033 = vmatpush2.msra.mxu0 0.0
      %1034 = vmatprep.subr.mxu0 0.0
      %1035 = vmatpush2.msra.mxu0 0.0
      %1036 = vmatprep.subr.mxu0 0.0
      %1037 = vmatpush2.msra.mxu0 0.0
      %1038 = vmatprep.subr.mxu0 0.0
      %1039 = vmatpush2.msra.mxu0 0.0
      %1040 = vmatprep.subr.mxu0 0.0
      %1041 = vmatpush2.msra.mxu0 0.0
      %1042 = vmatprep.subr.mxu0 0.0
      %1043 = vmatpush2.msra.mxu0 0.0
      %1044 = vmatprep.subr.mxu0 0.0
      %1045 = vmatpush2.msra.mxu0 0.0
      %1046 = vmatprep.subr.mxu0 0.0
      %1047 = vmatpush2.msra.mxu0 0.0
      %1048 = vmatprep.subr.mxu0 0.0
      %1049 = vmatpush2.msra.mxu0 0.0
      %1050 = vmatprep.subr.mxu0 0.0
      %1051 = vmatpush2.msra.mxu0 0.0
      %1052 = vmatprep.subr.mxu0 0.0
      %1053 = vmatpush2.msra.mxu0 0.0
      %1054 = vmatprep.subr.mxu0 0.0
      %1055 = vmatpush2.msra.mxu0 0.0
      %1056 = vmatprep.subr.mxu0 0.0
      %1057 = vmatpush2.msra.mxu0 0.0
      %1058 = vmatprep.subr.mxu0 0.0
      %1059 = vmatpush2.msra.mxu0 0.0
      %1060 = vmatprep.subr.mxu0 0.0
      %1061 = vmatpush2.msra.mxu0 0.0
      %1062 = vmatprep.mubr.f32.mxu0 0.0
      %1063 = vmatmul.mubr.f32.gmra.mxu0 %v982
      %v1064 = vpop.f32.mrf.mxu0
      %v1065 = vadd.f32 %v281, %v1064
      %v1066 = vpop.f32.mrf.mxu0
      %1067 = vmatprep.mubr.f32.mxu0 0.0
      %1068 = vmatmul.mubr.f32.gmra.mxu0 %v983
      %v1069 = vpop.f32.mrf.mxu0
      %v1070 = vadd.f32 %v281, %v1069
      %v1071 = vpop.f32.mrf.mxu0
      %1072 = vmatprep.mubr.f32.mxu0 0.0
      %1073 = vmatmul.mubr.f32.gmra.mxu0 %v984
      %v1074 = vpop.f32.mrf.mxu0
      %v1075 = vadd.f32 %v281, %v1074
      %v1076 = vpop.f32.mrf.mxu0
      %1077 = vmatprep.mubr.f32.mxu0 0.0
      %1078 = vmatmul.mubr.f32.gmra.mxu0 %v985
      %v1079 = vpop.f32.mrf.mxu0
      %v1080 = vadd.f32 %v281, %v1079
      %v1081 = vpop.f32.mrf.mxu0
      %1082 = vmatprep.mubr.f32.mxu0 0.0
      %1083 = vmatmul.mubr.f32.gmra.mxu0 %v986
      %v1084 = vpop.f32.mrf.mxu0
      %v1085 = vadd.f32 %v281, %v1084
      %v1086 = vpop.f32.mrf.mxu0
      %1087 = vmatprep.mubr.f32.mxu0 0.0
      %1088 = vmatmul.mubr.f32.gmra.mxu0 %v987
      %v1089 = vpop.f32.mrf.mxu0
      %v1090 = vadd.f32 %v281, %v1089
      %v1091 = vpop.f32.mrf.mxu0
      %1092 = vmatprep.mubr.f32.mxu0 0.0
      %1093 = vmatmul.mubr.f32.gmra.mxu0 %v988
      %v1094 = vpop.f32.mrf.mxu0
      %v1095 = vadd.f32 %v281, %v1094
      %v1096 = vpop.f32.mrf.mxu0
      %1097 = vmatprep.mubr.f32.mxu0 0.0
      %1098 = vmatmul.mubr.f32.gmra.mxu0 %v989
      %v1099 = vpop.f32.mrf.mxu0
      %v1100 = vadd.f32 %v281, %v1099
      %v1101 = vpop.f32.mrf.mxu0
      %1102 = vmatprep.mubr.f32.mxu0 0.0
      %1103 = vmatmul.mubr.f32.gmra.mxu0 %v990
      %v1104 = vpop.f32.mrf.mxu0
      %v1105 = vadd.f32 %v281, %v1104
      %v1106 = vpop.f32.mrf.mxu0
      %1107 = vmatprep.mubr.f32.mxu0 0.0
      %1108 = vmatmul.mubr.f32.gmra.mxu0 %v991
      %v1109 = vpop.f32.mrf.mxu0
      %v1110 = vadd.f32 %v281, %v1109
      %v1111 = vpop.f32.mrf.mxu0
      %1112 = vmatprep.mubr.f32.mxu0 0.0
      %1113 = vmatmul.mubr.f32.gmra.mxu0 %v992
      %v1114 = vpop.f32.mrf.mxu0
      %v1115 = vadd.f32 %v281, %v1114
      %v1116 = vpop.f32.mrf.mxu0
      %1117 = vmatprep.mubr.f32.mxu0 0.0
      %1118 = vmatmul.mubr.f32.gmra.mxu0 %v993
      %v1119 = vpop.f32.mrf.mxu0
      %v1120 = vadd.f32 %v281, %v1119
      %v1121 = vpop.f32.mrf.mxu0
      %1122 = vmatprep.mubr.f32.mxu0 0.0
      %1123 = vmatmul.mubr.f32.gmra.mxu0 %v994
      %v1124 = vpop.f32.mrf.mxu0
      %v1125 = vadd.f32 %v281, %v1124
      %v1126 = vpop.f32.mrf.mxu0
      %1127 = vmatprep.mubr.f32.mxu0 0.0
      %1128 = vmatmul.mubr.f32.gmra.mxu0 %v995
      %v1129 = vpop.f32.mrf.mxu0
      %v1130 = vadd.f32 %v281, %v1129
      %v1131 = vpop.f32.mrf.mxu0
      %1132 = vmatprep.mubr.f32.mxu0 0.0
      %1133 = vmatmul.mubr.f32.gmra.mxu0 %v996
      %v1134 = vpop.f32.mrf.mxu0
      %v1135 = vadd.f32 %v281, %v1134
      %v1136 = vpop.f32.mrf.mxu0
      %1137 = vmatprep.mubr.f32.mxu0 0.0
      %1138 = vmatmul.mubr.f32.gmra.mxu0 %v997
      %v1139 = vpop.f32.mrf.mxu0
      %v1140 = vadd.f32 %v281, %v1139
      %v1141 = vpop.f32.mrf.mxu0
      %1142 = vdwg.mxu0
      %v1143 = vtanh.pop %v1065
      %v1144 = vtanh.pop %v1070
      %v1145 = vtanh.pop %v1075
      %v1146 = vtanh.pop %v1080
      %v1147 = vtanh.pop %v1085
      %v1148 = vtanh.pop %v1090
      %v1149 = vtanh.pop %v1095
      %v1150 = vtanh.pop %v1100
      %v1151 = vtanh.pop %v1105
      %v1152 = vtanh.pop %v1110
      %v1153 = vtanh.pop %v1115
      %v1154 = vtanh.pop %v1120
      %v1155 = vtanh.pop %v1125
      %v1156 = vtanh.pop %v1130
      %v1157 = vtanh.pop %v1135
      %v1158 = vtanh.pop %v1140
      %1159 = vmatprep.subr.mxu0 0.0
      %1160 = vmatpush1.msra.mxu0 %v275
      %1161 = vmatprep.subr.mxu0 0.0
      %1162 = vmatpush1.msra.mxu0 %v274
      %1163 = vmatprep.subr.mxu0 0.0
      %1164 = vmatpush1.msra.mxu0 %v273
      %1165 = vmatprep.subr.mxu0 0.0
      %1166 = vmatpush1.msra.mxu0 %v272
      %1167 = vmatprep.subr.mxu0 0.0
      %1168 = vmatpush1.msra.mxu0 %v271
      %1169 = vmatprep.subr.mxu0 0.0
      %1170 = vmatpush1.msra.mxu0 %v270
      %1171 = vmatprep.subr.mxu0 0.0
      %1172 = vmatpush1.msra.mxu0 %v269
      %1173 = vmatprep.subr.mxu0 0.0
      %1174 = vmatpush1.msra.mxu0 %v268
      %1175 = vmatprep.subr.mxu0 0.0
      %1176 = vmatpush1.msra.mxu0 %v267
      %1177 = vmatprep.subr.mxu0 0.0
      %1178 = vmatpush1.msra.mxu0 %v266
      %1179 = vmatprep.subr.mxu0 0.0
      %1180 = vmatpush1.msra.mxu0 %v265
      %1181 = vmatprep.subr.mxu0 0.0
      %1182 = vmatpush1.msra.mxu0 %v264
      %1183 = vmatprep.subr.mxu0 0.0
      %1184 = vmatpush1.msra.mxu0 %v263
      %1185 = vmatprep.subr.mxu0 0.0
      %1186 = vmatpush1.msra.mxu0 %v262
      %1187 = vmatprep.subr.mxu0 0.0
      %1188 = vmatpush1.msra.mxu0 %v261
      %1189 = vmatprep.subr.mxu0 0.0
      %1190 = vmatpush1.msra.mxu0 %v260
      %1191 = vmatprep.subr.mxu0 0.0
      %1192 = vmatpush2.msra.mxu0 0.0
      %1193 = vmatprep.subr.mxu0 0.0
      %1194 = vmatpush2.msra.mxu0 0.0
      %1195 = vmatprep.subr.mxu0 0.0
      %1196 = vmatpush2.msra.mxu0 0.0
      %1197 = vmatprep.subr.mxu0 0.0
      %1198 = vmatpush2.msra.mxu0 0.0
      %1199 = vmatprep.subr.mxu0 0.0
      %1200 = vmatpush2.msra.mxu0 0.0
      %1201 = vmatprep.subr.mxu0 0.0
      %1202 = vmatpush2.msra.mxu0 0.0
      %1203 = vmatprep.subr.mxu0 0.0
      %1204 = vmatpush2.msra.mxu0 0.0
      %1205 = vmatprep.subr.mxu0 0.0
      %1206 = vmatpush2.msra.mxu0 0.0
      %1207 = vmatprep.subr.mxu0 0.0
      %1208 = vmatpush2.msra.mxu0 0.0
      %1209 = vmatprep.subr.mxu0 0.0
      %1210 = vmatpush2.msra.mxu0 0.0
      %1211 = vmatprep.subr.mxu0 0.0
      %1212 = vmatpush2.msra.mxu0 0.0
      %1213 = vmatprep.subr.mxu0 0.0
      %1214 = vmatpush2.msra.mxu0 0.0
      %1215 = vmatprep.subr.mxu0 0.0
      %1216 = vmatpush2.msra.mxu0 0.0
      %1217 = vmatprep.subr.mxu0 0.0
      %1218 = vmatpush2.msra.mxu0 0.0
      %1219 = vmatprep.subr.mxu0 0.0
      %1220 = vmatpush2.msra.mxu0 0.0
      %1221 = vmatprep.subr.mxu0 0.0
      %1222 = vmatpush2.msra.mxu0 0.0
      %1223 = vmatprep.mubr.f32.mxu0 0.0
      %1224 = vmatmul.mubr.f32.gmra.mxu0 %v1143
      %v1225 = vpop.f32.mrf.mxu0
      %v1226 = vadd.f32 %v288, %v1225
      %v1227 = vpop.f32.mrf.mxu0
      %1228 = vmatprep.mubr.f32.mxu0 0.0
      %1229 = vmatmul.mubr.f32.gmra.mxu0 %v1144
      %v1230 = vpop.f32.mrf.mxu0
      %v1231 = vadd.f32 %v288, %v1230
      %v1232 = vpop.f32.mrf.mxu0
      %1233 = vmatprep.mubr.f32.mxu0 0.0
      %1234 = vmatmul.mubr.f32.gmra.mxu0 %v1145
      %v1235 = vpop.f32.mrf.mxu0
      %v1236 = vadd.f32 %v288, %v1235
      %v1237 = vpop.f32.mrf.mxu0
      %1238 = vmatprep.mubr.f32.mxu0 0.0
      %1239 = vmatmul.mubr.f32.gmra.mxu0 %v1146
      %v1240 = vpop.f32.mrf.mxu0
      %v1241 = vadd.f32 %v288, %v1240
      %v1242 = vpop.f32.mrf.mxu0
      %1243 = vmatprep.mubr.f32.mxu0 0.0
      %1244 = vmatmul.mubr.f32.gmra.mxu0 %v1147
      %v1245 = vpop.f32.mrf.mxu0
      %v1246 = vadd.f32 %v288, %v1245
      %v1247 = vpop.f32.mrf.mxu0
      %1248 = vmatprep.mubr.f32.mxu0 0.0
      %1249 = vmatmul.mubr.f32.gmra.mxu0 %v1148
      %v1250 = vpop.f32.mrf.mxu0
      %v1251 = vadd.f32 %v288, %v1250
      %v1252 = vpop.f32.mrf.mxu0
      %1253 = vmatprep.mubr.f32.mxu0 0.0
      %1254 = vmatmul.mubr.f32.gmra.mxu0 %v1149
      %v1255 = vpop.f32.mrf.mxu0
      %v1256 = vadd.f32 %v288, %v1255
      %v1257 = vpop.f32.mrf.mxu0
      %1258 = vmatprep.mubr.f32.mxu0 0.0
      %1259 = vmatmul.mubr.f32.gmra.mxu0 %v1150
      %v1260 = vpop.f32.mrf.mxu0
      %v1261 = vadd.f32 %v288, %v1260
      %v1262 = vpop.f32.mrf.mxu0
      %1263 = vmatprep.mubr.f32.mxu0 0.0
      %1264 = vmatmul.mubr.f32.gmra.mxu0 %v1151
      %v1265 = vpop.f32.mrf.mxu0
      %v1266 = vadd.f32 %v288, %v1265
      %v1267 = vpop.f32.mrf.mxu0
      %1268 = vmatprep.mubr.f32.mxu0 0.0
      %1269 = vmatmul.mubr.f32.gmra.mxu0 %v1152
      %v1270 = vpop.f32.mrf.mxu0
      %v1271 = vadd.f32 %v288, %v1270
      %v1272 = vpop.f32.mrf.mxu0
      %1273 = vmatprep.mubr.f32.mxu0 0.0
      %1274 = vmatmul.mubr.f32.gmra.mxu0 %v1153
      %v1275 = vpop.f32.mrf.mxu0
      %v1276 = vadd.f32 %v288, %v1275
      %v1277 = vpop.f32.mrf.mxu0
      %1278 = vmatprep.mubr.f32.mxu0 0.0
      %1279 = vmatmul.mubr.f32.gmra.mxu0 %v1154
      %v1280 = vpop.f32.mrf.mxu0
      %v1281 = vadd.f32 %v288, %v1280
      %v1282 = vpop.f32.mrf.mxu0
      %1283 = vmatprep.mubr.f32.mxu0 0.0
      %1284 = vmatmul.mubr.f32.gmra.mxu0 %v1155
      %v1285 = vpop.f32.mrf.mxu0
      %v1286 = vadd.f32 %v288, %v1285
      %v1287 = vpop.f32.mrf.mxu0
      %1288 = vmatprep.mubr.f32.mxu0 0.0
      %1289 = vmatmul.mubr.f32.gmra.mxu0 %v1156
      %v1290 = vpop.f32.mrf.mxu0
      %v1291 = vadd.f32 %v288, %v1290
      %v1292 = vpop.f32.mrf.mxu0
      %1293 = vmatprep.mubr.f32.mxu0 0.0
      %1294 = vmatmul.mubr.f32.gmra.mxu0 %v1157
      %v1295 = vpop.f32.mrf.mxu0
      %v1296 = vadd.f32 %v288, %v1295
      %v1297 = vpop.f32.mrf.mxu0
      %1298 = vmatprep.mubr.f32.mxu0 0.0
      %1299 = vmatmul.mubr.f32.gmra.mxu0 %v1158
      %v1300 = vpop.f32.mrf.mxu0
      %v1301 = vadd.f32 %v288, %v1300
      %v1302 = vpop.f32.mrf.mxu0
      %1303 = vdwg.mxu0
      %v1304 = vtanh.pop %v1226
      %v1305 = vtanh.pop %v1231
      %v1306 = vtanh.pop %v1236
      %v1307 = vtanh.pop %v1241
      %v1308 = vtanh.pop %v1246
      %v1309 = vtanh.pop %v1251
      %v1310 = vtanh.pop %v1256
      %v1311 = vtanh.pop %v1261
      %v1312 = vtanh.pop %v1266
      %v1313 = vtanh.pop %v1271
      %v1314 = vtanh.pop %v1276
      %v1315 = vtanh.pop %v1281
      %v1316 = vtanh.pop %v1286
      %v1317 = vtanh.pop %v1291
      %v1318 = vtanh.pop %v1296
      %v1319 = vtanh.pop %v1301
      %v1320 = vsub.f32 %v596, %v950
      %v1321 = vsub.f32 %v597, %v951
      %v1322 = vsub.f32 %v598, %v952
      %v1323 = vsub.f32 %v599, %v953
      %v1324 = vsub.f32 %v600, %v954
      %v1325 = vsub.f32 %v601, %v955
      %v1326 = vsub.f32 %v602, %v956
      %v1327 = vsub.f32 %v603, %v957
      %v1328 = vsub.f32 %v604, %v958
      %v1329 = vsub.f32 %v605, %v959
      %v1330 = vsub.f32 %v606, %v960
      %v1331 = vsub.f32 %v607, %v961
      %v1332 = vsub.f32 %v608, %v962
      %v1333 = vsub.f32 %v609, %v963
      %v1334 = vsub.f32 %v610, %v964
      %v1335 = vsub.f32 %v611, %v965
      %v1336 = vadd.f32 %v1320, %v1304
      %v1337 = vadd.f32 %v1321, %v1305
      %v1338 = vadd.f32 %v1322, %v1306
      %v1339 = vadd.f32 %v1323, %v1307
      %v1340 = vadd.f32 %v1324, %v1308
      %v1341 = vadd.f32 %v1325, %v1309
      %v1342 = vadd.f32 %v1326, %v1310
      %v1343 = vadd.f32 %v1327, %v1311
      %v1344 = vadd.f32 %v1328, %v1312
      %v1345 = vadd.f32 %v1329, %v1313
      %v1346 = vadd.f32 %v1330, %v1314
      %v1347 = vadd.f32 %v1331, %v1315
      %v1348 = vadd.f32 %v1332, %v1316
      %v1349 = vadd.f32 %v1333, %v1317
      %v1350 = vadd.f32 %v1334, %v1318
      %v1351 = vadd.f32 %v1335, %v1319
      %v1352 = vadd.f32 %v228, %v1336
      %v1353 = vadd.f32 %v229, %v1337
      %v1354 = vadd.f32 %v230, %v1338
      %v1355 = vadd.f32 %v231, %v1339
      %v1356 = vadd.f32 %v232, %v1340
      %v1357 = vadd.f32 %v233, %v1341
      %v1358 = vadd.f32 %v234, %v1342
      %v1359 = vadd.f32 %v235, %v1343
      %v1360 = vadd.f32 %v236, %v1344
      %v1361 = vadd.f32 %v237, %v1345
      %v1362 = vadd.f32 %v238, %v1346
      %v1363 = vadd.f32 %v239, %v1347
      %v1364 = vadd.f32 %v240, %v1348
      %v1365 = vadd.f32 %v241, %v1349
      %v1366 = vadd.f32 %v242, %v1350
      %v1367 = vadd.f32 %v243, %v1351
      %1368 = vmatprep.subr.mxu0 0.0
      %1369 = vmatpush1.msra.mxu0 %v259
      %1370 = vmatprep.subr.mxu0 0.0
      %1371 = vmatpush1.msra.mxu0 %v258
      %1372 = vmatprep.subr.mxu0 0.0
      %1373 = vmatpush1.msra.mxu0 %v257
      %1374 = vmatprep.subr.mxu0 0.0
      %1375 = vmatpush1.msra.mxu0 %v256
      %1376 = vmatprep.subr.mxu0 0.0
      %1377 = vmatpush1.msra.mxu0 %v255
      %1378 = vmatprep.subr.mxu0 0.0
      %1379 = vmatpush1.msra.mxu0 %v254
      %1380 = vmatprep.subr.mxu0 0.0
      %1381 = vmatpush1.msra.mxu0 %v253
      %1382 = vmatprep.subr.mxu0 0.0
      %1383 = vmatpush1.msra.mxu0 %v252
      %1384 = vmatprep.subr.mxu0 0.0
      %1385 = vmatpush1.msra.mxu0 %v251
      %1386 = vmatprep.subr.mxu0 0.0
      %1387 = vmatpush1.msra.mxu0 %v250
      %1388 = vmatprep.subr.mxu0 0.0
      %1389 = vmatpush1.msra.mxu0 %v249
      %1390 = vmatprep.subr.mxu0 0.0
      %1391 = vmatpush1.msra.mxu0 %v248
      %1392 = vmatprep.subr.mxu0 0.0
      %1393 = vmatpush1.msra.mxu0 %v247
      %1394 = vmatprep.subr.mxu0 0.0
      %1395 = vmatpush1.msra.mxu0 %v246
      %1396 = vmatprep.subr.mxu0 0.0
      %1397 = vmatpush1.msra.mxu0 %v245
      %1398 = vmatprep.subr.mxu0 0.0
      %1399 = vmatpush1.msra.mxu0 %v244
      %1400 = vmatprep.subr.mxu0 0.0
      %1401 = vmatpush2.msra.mxu0 0.0
      %1402 = vmatprep.subr.mxu0 0.0
      %1403 = vmatpush2.msra.mxu0 0.0
      %1404 = vmatprep.subr.mxu0 0.0
      %1405 = vmatpush2.msra.mxu0 0.0
      %1406 = vmatprep.subr.mxu0 0.0
      %1407 = vmatpush2.msra.mxu0 0.0
      %1408 = vmatprep.subr.mxu0 0.0
      %1409 = vmatpush2.msra.mxu0 0.0
      %1410 = vmatprep.subr.mxu0 0.0
      %1411 = vmatpush2.msra.mxu0 0.0
      %1412 = vmatprep.subr.mxu0 0.0
      %1413 = vmatpush2.msra.mxu0 0.0
      %1414 = vmatprep.subr.mxu0 0.0
      %1415 = vmatpush2.msra.mxu0 0.0
      %1416 = vmatprep.subr.mxu0 0.0
      %1417 = vmatpush2.msra.mxu0 0.0
      %1418 = vmatprep.subr.mxu0 0.0
      %1419 = vmatpush2.msra.mxu0 0.0
      %1420 = vmatprep.subr.mxu0 0.0
      %1421 = vmatpush2.msra.mxu0 0.0
      %1422 = vmatprep.subr.mxu0 0.0
      %1423 = vmatpush2.msra.mxu0 0.0
      %1424 = vmatprep.subr.mxu0 0.0
      %1425 = vmatpush2.msra.mxu0 0.0
      %1426 = vmatprep.subr.mxu0 0.0
      %1427 = vmatpush2.msra.mxu0 0.0
      %1428 = vmatprep.subr.mxu0 0.0
      %1429 = vmatpush2.msra.mxu0 0.0
      %1430 = vmatprep.subr.mxu0 0.0
      %1431 = vmatpush2.msra.mxu0 0.0
      %1432 = vmatprep.mubr.f32.mxu0 0.0
      %1433 = vmatmul.mubr.f32.gmra.mxu0 %v1352
      %v1434 = vpop.f32.mrf.mxu0
      %v1435 = vadd.f32 %v281, %v1434
      %v1436 = vpop.f32.mrf.mxu0
      %1437 = vmatprep.mubr.f32.mxu0 0.0
      %1438 = vmatmul.mubr.f32.gmra.mxu0 %v1353
      %v1439 = vpop.f32.mrf.mxu0
      %v1440 = vadd.f32 %v281, %v1439
      %v1441 = vpop.f32.mrf.mxu0
      %1442 = vmatprep.mubr.f32.mxu0 0.0
      %1443 = vmatmul.mubr.f32.gmra.mxu0 %v1354
      %v1444 = vpop.f32.mrf.mxu0
      %v1445 = vadd.f32 %v281, %v1444
      %v1446 = vpop.f32.mrf.mxu0
      %1447 = vmatprep.mubr.f32.mxu0 0.0
      %1448 = vmatmul.mubr.f32.gmra.mxu0 %v1355
      %v1449 = vpop.f32.mrf.mxu0
      %v1450 = vadd.f32 %v281, %v1449
      %v1451 = vpop.f32.mrf.mxu0
      %1452 = vmatprep.mubr.f32.mxu0 0.0
      %1453 = vmatmul.mubr.f32.gmra.mxu0 %v1356
      %v1454 = vpop.f32.mrf.mxu0
      %v1455 = vadd.f32 %v281, %v1454
      %v1456 = vpop.f32.mrf.mxu0
      %1457 = vmatprep.mubr.f32.mxu0 0.0
      %1458 = vmatmul.mubr.f32.gmra.mxu0 %v1357
      %v1459 = vpop.f32.mrf.mxu0
      %v1460 = vadd.f32 %v281, %v1459
      %v1461 = vpop.f32.mrf.mxu0
      %1462 = vmatprep.mubr.f32.mxu0 0.0
      %1463 = vmatmul.mubr.f32.gmra.mxu0 %v1358
      %v1464 = vpop.f32.mrf.mxu0
      %v1465 = vadd.f32 %v281, %v1464
      %v1466 = vpop.f32.mrf.mxu0
      %1467 = vmatprep.mubr.f32.mxu0 0.0
      %1468 = vmatmul.mubr.f32.gmra.mxu0 %v1359
      %v1469 = vpop.f32.mrf.mxu0
      %v1470 = vadd.f32 %v281, %v1469
      %v1471 = vpop.f32.mrf.mxu0
      %1472 = vmatprep.mubr.f32.mxu0 0.0
      %1473 = vmatmul.mubr.f32.gmra.mxu0 %v1360
      %v1474 = vpop.f32.mrf.mxu0
      %v1475 = vadd.f32 %v281, %v1474
      %v1476 = vpop.f32.mrf.mxu0
      %1477 = vmatprep.mubr.f32.mxu0 0.0
      %1478 = vmatmul.mubr.f32.gmra.mxu0 %v1361
      %v1479 = vpop.f32.mrf.mxu0
      %v1480 = vadd.f32 %v281, %v1479
      %v1481 = vpop.f32.mrf.mxu0
      %1482 = vmatprep.mubr.f32.mxu0 0.0
      %1483 = vmatmul.mubr.f32.gmra.mxu0 %v1362
      %v1484 = vpop.f32.mrf.mxu0
      %v1485 = vadd.f32 %v281, %v1484
      %v1486 = vpop.f32.mrf.mxu0
      %1487 = vmatprep.mubr.f32.mxu0 0.0
      %1488 = vmatmul.mubr.f32.gmra.mxu0 %v1363
      %v1489 = vpop.f32.mrf.mxu0
      %v1490 = vadd.f32 %v281, %v1489
      %v1491 = vpop.f32.mrf.mxu0
      %1492 = vmatprep.mubr.f32.mxu0 0.0
      %1493 = vmatmul.mubr.f32.gmra.mxu0 %v1364
      %v1494 = vpop.f32.mrf.mxu0
      %v1495 = vadd.f32 %v281, %v1494
      %v1496 = vpop.f32.mrf.mxu0
      %1497 = vmatprep.mubr.f32.mxu0 0.0
      %1498 = vmatmul.mubr.f32.gmra.mxu0 %v1365
      %v1499 = vpop.f32.mrf.mxu0
      %v1500 = vadd.f32 %v281, %v1499
      %v1501 = vpop.f32.mrf.mxu0
      %1502 = vmatprep.mubr.f32.mxu0 0.0
      %1503 = vmatmul.mubr.f32.gmra.mxu0 %v1366
      %v1504 = vpop.f32.mrf.mxu0
      %v1505 = vadd.f32 %v281, %v1504
      %v1506 = vpop.f32.mrf.mxu0
      %1507 = vmatprep.mubr.f32.mxu0 0.0
      %1508 = vmatmul.mubr.f32.gmra.mxu0 %v1367
      %v1509 = vpop.f32.mrf.mxu0
      %v1510 = vadd.f32 %v281, %v1509
      %v1511 = vpop.f32.mrf.mxu0
      %1512 = vdwg.mxu0
      %v1513 = vtanh.pop %v1435
      %v1514 = vtanh.pop %v1440
      %v1515 = vtanh.pop %v1445
      %v1516 = vtanh.pop %v1450
      %v1517 = vtanh.pop %v1455
      %v1518 = vtanh.pop %v1460
      %v1519 = vtanh.pop %v1465
      %v1520 = vtanh.pop %v1470
      %v1521 = vtanh.pop %v1475
      %v1522 = vtanh.pop %v1480
      %v1523 = vtanh.pop %v1485
      %v1524 = vtanh.pop %v1490
      %v1525 = vtanh.pop %v1495
      %v1526 = vtanh.pop %v1500
      %v1527 = vtanh.pop %v1505
      %v1528 = vtanh.pop %v1510
      %1529 = vmatprep.subr.mxu0 0.0
      %1530 = vmatpush1.msra.mxu0 %v275
      %1531 = vmatprep.subr.mxu0 0.0
      %1532 = vmatpush1.msra.mxu0 %v274
      %1533 = vmatprep.subr.mxu0 0.0
      %1534 = vmatpush1.msra.mxu0 %v273
      %1535 = vmatprep.subr.mxu0 0.0
      %1536 = vmatpush1.msra.mxu0 %v272
      %1537 = vmatprep.subr.mxu0 0.0
      %1538 = vmatpush1.msra.mxu0 %v271
      %1539 = vmatprep.subr.mxu0 0.0
      %1540 = vmatpush1.msra.mxu0 %v270
      %1541 = vmatprep.subr.mxu0 0.0
      %1542 = vmatpush1.msra.mxu0 %v269
      %1543 = vmatprep.subr.mxu0 0.0
      %1544 = vmatpush1.msra.mxu0 %v268
      %1545 = vmatprep.subr.mxu0 0.0
      %1546 = vmatpush1.msra.mxu0 %v267
      %1547 = vmatprep.subr.mxu0 0.0
      %1548 = vmatpush1.msra.mxu0 %v266
      %1549 = vmatprep.subr.mxu0 0.0
      %1550 = vmatpush1.msra.mxu0 %v265
      %1551 = vmatprep.subr.mxu0 0.0
      %1552 = vmatpush1.msra.mxu0 %v264
      %1553 = vmatprep.subr.mxu0 0.0
      %1554 = vmatpush1.msra.mxu0 %v263
      %1555 = vmatprep.subr.mxu0 0.0
      %1556 = vmatpush1.msra.mxu0 %v262
      %1557 = vmatprep.subr.mxu0 0.0
      %1558 = vmatpush1.msra.mxu0 %v261
      %1559 = vmatprep.subr.mxu0 0.0
      %1560 = vmatpush1.msra.mxu0 %v260
      %1561 = vmatprep.subr.mxu0 0.0
      %1562 = vmatpush2.msra.mxu0 0.0
      %1563 = vmatprep.subr.mxu0 0.0
      %1564 = vmatpush2.msra.mxu0 0.0
      %1565 = vmatprep.subr.mxu0 0.0
      %1566 = vmatpush2.msra.mxu0 0.0
      %1567 = vmatprep.subr.mxu0 0.0
      %1568 = vmatpush2.msra.mxu0 0.0
      %1569 = vmatprep.subr.mxu0 0.0
      %1570 = vmatpush2.msra.mxu0 0.0
      %1571 = vmatprep.subr.mxu0 0.0
      %1572 = vmatpush2.msra.mxu0 0.0
      %1573 = vmatprep.subr.mxu0 0.0
      %1574 = vmatpush2.msra.mxu0 0.0
      %1575 = vmatprep.subr.mxu0 0.0
      %1576 = vmatpush2.msra.mxu0 0.0
      %1577 = vmatprep.subr.mxu0 0.0
      %1578 = vmatpush2.msra.mxu0 0.0
      %1579 = vmatprep.subr.mxu0 0.0
      %1580 = vmatpush2.msra.mxu0 0.0
      %1581 = vmatprep.subr.mxu0 0.0
      %1582 = vmatpush2.msra.mxu0 0.0
      %1583 = vmatprep.subr.mxu0 0.0
      %1584 = vmatpush2.msra.mxu0 0.0
      %1585 = vmatprep.subr.mxu0 0.0
      %1586 = vmatpush2.msra.mxu0 0.0
      %1587 = vmatprep.subr.mxu0 0.0
      %1588 = vmatpush2.msra.mxu0 0.0
      %1589 = vmatprep.subr.mxu0 0.0
      %1590 = vmatpush2.msra.mxu0 0.0
      %1591 = vmatprep.subr.mxu0 0.0
      %1592 = vmatpush2.msra.mxu0 0.0
      %1593 = vmatprep.mubr.f32.mxu0 0.0
      %1594 = vmatmul.mubr.f32.gmra.mxu0 %v1513
      %v1595 = vpop.f32.mrf.mxu0
      %v1596 = vadd.f32 %v288, %v1595
      %v1597 = vpop.f32.mrf.mxu0
      %1598 = vmatprep.mubr.f32.mxu0 0.0
      %1599 = vmatmul.mubr.f32.gmra.mxu0 %v1514
      %v1600 = vpop.f32.mrf.mxu0
      %v1601 = vadd.f32 %v288, %v1600
      %v1602 = vpop.f32.mrf.mxu0
      %1603 = vmatprep.mubr.f32.mxu0 0.0
      %1604 = vmatmul.mubr.f32.gmra.mxu0 %v1515
      %v1605 = vpop.f32.mrf.mxu0
      %v1606 = vadd.f32 %v288, %v1605
      %v1607 = vpop.f32.mrf.mxu0
      %1608 = vmatprep.mubr.f32.mxu0 0.0
      %1609 = vmatmul.mubr.f32.gmra.mxu0 %v1516
      %v1610 = vpop.f32.mrf.mxu0
      %v1611 = vadd.f32 %v288, %v1610
      %v1612 = vpop.f32.mrf.mxu0
      %1613 = vmatprep.mubr.f32.mxu0 0.0
      %1614 = vmatmul.mubr.f32.gmra.mxu0 %v1517
      %v1615 = vpop.f32.mrf.mxu0
      %v1616 = vadd.f32 %v288, %v1615
      %v1617 = vpop.f32.mrf.mxu0
      %1618 = vmatprep.mubr.f32.mxu0 0.0
      %1619 = vmatmul.mubr.f32.gmra.mxu0 %v1518
      %v1620 = vpop.f32.mrf.mxu0
      %v1621 = vadd.f32 %v288, %v1620
      %v1622 = vpop.f32.mrf.mxu0
      %1623 = vmatprep.mubr.f32.mxu0 0.0
      %1624 = vmatmul.mubr.f32.gmra.mxu0 %v1519
      %v1625 = vpop.f32.mrf.mxu0
      %v1626 = vadd.f32 %v288, %v1625
      %v1627 = vpop.f32.mrf.mxu0
      %1628 = vmatprep.mubr.f32.mxu0 0.0
      %1629 = vmatmul.mubr.f32.gmra.mxu0 %v1520
      %v1630 = vpop.f32.mrf.mxu0
      %v1631 = vadd.f32 %v288, %v1630
      %v1632 = vpop.f32.mrf.mxu0
      %1633 = vmatprep.mubr.f32.mxu0 0.0
      %1634 = vmatmul.mubr.f32.gmra.mxu0 %v1521
      %v1635 = vpop.f32.mrf.mxu0
      %v1636 = vadd.f32 %v288, %v1635
      %v1637 = vpop.f32.mrf.mxu0
      %1638 = vmatprep.mubr.f32.mxu0 0.0
      %1639 = vmatmul.mubr.f32.gmra.mxu0 %v1522
      %v1640 = vpop.f32.mrf.mxu0
      %v1641 = vadd.f32 %v288, %v1640
      %v1642 = vpop.f32.mrf.mxu0
      %1643 = vmatprep.mubr.f32.mxu0 0.0
      %1644 = vmatmul.mubr.f32.gmra.mxu0 %v1523
      %v1645 = vpop.f32.mrf.mxu0
      %v1646 = vadd.f32 %v288, %v1645
      %v1647 = vpop.f32.mrf.mxu0
      %1648 = vmatprep.mubr.f32.mxu0 0.0
      %1649 = vmatmul.mubr.f32.gmra.mxu0 %v1524
      %v1650 = vpop.f32.mrf.mxu0
      %v1651 = vadd.f32 %v288, %v1650
      %v1652 = vpop.f32.mrf.mxu0
      %1653 = vmatprep.mubr.f32.mxu0 0.0
      %1654 = vmatmul.mubr.f32.gmra.mxu0 %v1525
      %v1655 = vpop.f32.mrf.mxu0
      %v1656 = vadd.f32 %v288, %v1655
      %v1657 = vpop.f32.mrf.mxu0
      %1658 = vmatprep.mubr.f32.mxu0 0.0
      %1659 = vmatmul.mubr.f32.gmra.mxu0 %v1526
      %v1660 = vpop.f32.mrf.mxu0
      %v1661 = vadd.f32 %v288, %v1660
      %v1662 = vpop.f32.mrf.mxu0
      %1663 = vmatprep.mubr.f32.mxu0 0.0
      %1664 = vmatmul.mubr.f32.gmra.mxu0 %v1527
      %v1665 = vpop.f32.mrf.mxu0
      %v1666 = vadd.f32 %v288, %v1665
      %v1667 = vpop.f32.mrf.mxu0
      %1668 = vmatprep.mubr.f32.mxu0 0.0
      %1669 = vmatmul.mubr.f32.gmra.mxu0 %v1528
      %v1670 = vpop.f32.mrf.mxu0
      %v1671 = vadd.f32 %v288, %v1670
      %v1672 = vpop.f32.mrf.mxu0
      %1673 = vdwg.mxu0
      %v1674 = vtanh.pop %v1596
      %v1675 = vtanh.pop %v1601
      %v1676 = vtanh.pop %v1606
      %v1677 = vtanh.pop %v1611
      %v1678 = vtanh.pop %v1616
      %v1679 = vtanh.pop %v1621
      %v1680 = vtanh.pop %v1626
      %v1681 = vtanh.pop %v1631
      %v1682 = vtanh.pop %v1636
      %v1683 = vtanh.pop %v1641
      %v1684 = vtanh.pop %v1646
      %v1685 = vtanh.pop %v1651
      %v1686 = vtanh.pop %v1656
      %v1687 = vtanh.pop %v1661
      %v1688 = vtanh.pop %v1666
      %v1689 = vtanh.pop %v1671
      %v1690 = vadd.f32 %v950, %v1304
      %v1691 = vadd.f32 %v951, %v1305
      %v1692 = vadd.f32 %v952, %v1306
      %v1693 = vadd.f32 %v953, %v1307
      %v1694 = vadd.f32 %v954, %v1308
      %v1695 = vadd.f32 %v955, %v1309
      %v1696 = vadd.f32 %v956, %v1310
      %v1697 = vadd.f32 %v957, %v1311
      %v1698 = vadd.f32 %v958, %v1312
      %v1699 = vadd.f32 %v959, %v1313
      %v1700 = vadd.f32 %v960, %v1314
      %v1701 = vadd.f32 %v961, %v1315
      %v1702 = vadd.f32 %v962, %v1316
      %v1703 = vadd.f32 %v963, %v1317
      %v1704 = vadd.f32 %v964, %v1318
      %v1705 = vadd.f32 %v965, %v1319
      %v1706 = vmul.f32 %v1690, 3.0
      %v1707 = vmul.f32 %v1691, 3.0
      %v1708 = vmul.f32 %v1692, 3.0
      %v1709 = vmul.f32 %v1693, 3.0
      %v1710 = vmul.f32 %v1694, 3.0
      %v1711 = vmul.f32 %v1695, 3.0
      %v1712 = vmul.f32 %v1696, 3.0
      %v1713 = vmul.f32 %v1697, 3.0
      %v1714 = vmul.f32 %v1698, 3.0
      %v1715 = vmul.f32 %v1699, 3.0
      %v1716 = vmul.f32 %v1700, 3.0
      %v1717 = vmul.f32 %v1701, 3.0
      %v1718 = vmul.f32 %v1702, 3.0
      %v1719 = vmul.f32 %v1703, 3.0
      %v1720 = vmul.f32 %v1704, 3.0
      %v1721 = vmul.f32 %v1705, 3.0
      %v1722 = vadd.f32 %v596, %v1706
      %v1723 = vadd.f32 %v597, %v1707
      %v1724 = vadd.f32 %v598, %v1708
      %v1725 = vadd.f32 %v599, %v1709
      %v1726 = vadd.f32 %v600, %v1710
      %v1727 = vadd.f32 %v601, %v1711
      %v1728 = vadd.f32 %v602, %v1712
      %v1729 = vadd.f32 %v603, %v1713
      %v1730 = vadd.f32 %v604, %v1714
      %v1731 = vadd.f32 %v605, %v1715
      %v1732 = vadd.f32 %v606, %v1716
      %v1733 = vadd.f32 %v607, %v1717
      %v1734 = vadd.f32 %v608, %v1718
      %v1735 = vadd.f32 %v609, %v1719
      %v1736 = vadd.f32 %v610, %v1720
      %v1737 = vadd.f32 %v611, %v1721
      %v1738 = vadd.f32 %v1722, %v1674
      %v1739 = vadd.f32 %v1723, %v1675
      %v1740 = vadd.f32 %v1724, %v1676
      %v1741 = vadd.f32 %v1725, %v1677
      %v1742 = vadd.f32 %v1726, %v1678
      %v1743 = vadd.f32 %v1727, %v1679
      %v1744 = vadd.f32 %v1728, %v1680
      %v1745 = vadd.f32 %v1729, %v1681
      %v1746 = vadd.f32 %v1730, %v1682
      %v1747 = vadd.f32 %v1731, %v1683
      %v1748 = vadd.f32 %v1732, %v1684
      %v1749 = vadd.f32 %v1733, %v1685
      %v1750 = vadd.f32 %v1734, %v1686
      %v1751 = vadd.f32 %v1735, %v1687
      %v1752 = vadd.f32 %v1736, %v1688
      %v1753 = vadd.f32 %v1737, %v1689
      %v1754 = vmul.f32 %v1738, 0.125
      %v1755 = vmul.f32 %v1739, 0.125
      %v1756 = vmul.f32 %v1740, 0.125
      %v1757 = vmul.f32 %v1741, 0.125
      %v1758 = vmul.f32 %v1742, 0.125
      %v1759 = vmul.f32 %v1743, 0.125
      %v1760 = vmul.f32 %v1744, 0.125
      %v1761 = vmul.f32 %v1745, 0.125
      %v1762 = vmul.f32 %v1746, 0.125
      %v1763 = vmul.f32 %v1747, 0.125
      %v1764 = vmul.f32 %v1748, 0.125
      %v1765 = vmul.f32 %v1749, 0.125
      %v1766 = vmul.f32 %v1750, 0.125
      %v1767 = vmul.f32 %v1751, 0.125
      %v1768 = vmul.f32 %v1752, 0.125
      %v1769 = vmul.f32 %v1753, 0.125
      %v1770 = vadd.f32 %v228, %v1754
      %v1771 = vadd.f32 %v229, %v1755
      %v1772 = vadd.f32 %v230, %v1756
      %v1773 = vadd.f32 %v231, %v1757
      %v1774 = vadd.f32 %v232, %v1758
      %v1775 = vadd.f32 %v233, %v1759
      %v1776 = vadd.f32 %v234, %v1760
      %v1777 = vadd.f32 %v235, %v1761
      %v1778 = vadd.f32 %v236, %v1762
      %v1779 = vadd.f32 %v237, %v1763
      %v1780 = vadd.f32 %v238, %v1764
      %v1781 = vadd.f32 %v239, %v1765
      %v1782 = vadd.f32 %v240, %v1766
      %v1783 = vadd.f32 %v241, %v1767
      %v1784 = vadd.f32 %v242, %v1768
      %v1785 = vadd.f32 %v243, %v1769
      %1786 = vst [vmem:[%s226] sm:$0xff] %v1770
      %1787 = vst [vmem:[%s226 + $0x8] sm:$0xff] %v1771
      %1788 = vst [vmem:[%s226 + $0x10] sm:$0xff] %v1772
      %1789 = vst [vmem:[%s226 + $0x18] sm:$0xff] %v1773
      %1790 = vst [vmem:[%s226 + $0x20] sm:$0xff] %v1774
      %1791 = vst [vmem:[%s226 + $0x28] sm:$0xff] %v1775
      %1792 = vst [vmem:[%s226 + $0x30] sm:$0xff] %v1776
      %1793 = vst [vmem:[%s226 + $0x38] sm:$0xff] %v1777
      %1794 = vst [vmem:[%s226 + $0x40] sm:$0xff] %v1778
      %1795 = vst [vmem:[%s226 + $0x48] sm:$0xff] %v1779
      %1796 = vst [vmem:[%s226 + $0x50] sm:$0xff] %v1780
      %1797 = vst [vmem:[%s226 + $0x58] sm:$0xff] %v1781
      %1798 = vst [vmem:[%s226 + $0x60] sm:$0xff] %v1782
      %1799 = vst [vmem:[%s226 + $0x68] sm:$0xff] %v1783
      %1800 = vst [vmem:[%s226 + $0x70] sm:$0xff] %v1784
      %1801 = vst [vmem:[%s226 + $0x78] sm:$0xff] %v1785
      %s1802 = smul.u32 16, %s16
      %p1803 = scmp.lt.s32.totalorder %s1802, 31
      %s1804 = scalar_select %p1803, %s1802, 31
      %s1805 = smul.addr %s1804, 8
      %s1806 = scalar_lea.vmem %s5, %s1805
      // Predicated region
      $region41: #{ode_block_forward.1} parent=39 // pred_check
        %p1807 = pneg %p144
      $region42: #{ode_block_forward.1} parent=39 // pred_check_branch
        %1809 = sbr.rel (%p1807) target = $region44
      $region43: #{ode_block_forward.1} parent=39 // pred_region
        %s1810 = smul.u32 16, %s16
      $region44: #{ode_block_forward.1} parent=39 // pred_fallthru
        _
    $region40: #{ode_block_forward.1} parent=5 // pred_fallthru
      _
    %p1811 = scmp.le.s32.totalorder 2, %s11
    // Predicated region
    $region45: #{ode_block_forward.1} parent=5 // pred_check
      %p1812 = pneg %p1811
    $region46: #{ode_block_forward.1} parent=5 // pred_check_branch
      %1814 = sbr.rel (%p1812) target = $region48
    $region47: #{ode_block_forward.1} parent=5 // pred_region
      %s1815 = ssub.s32 %s11, 2
      // Predicated region
      $region49: #{ode_block_forward.1} parent=47 // pred_check
        %p1816 = pneg %p150
      $region50: #{ode_block_forward.1} parent=47 // pred_check_branch
        %1818 = sbr.rel (%p1816) target = $region52
      $region51: #{ode_block_forward.1} parent=47 // pred_region
        %s1819 = smul.u32 16, %s17
        %p1820 = scmp.lt.s32.totalorder %s1819, 31
        %s1821 = scalar_select %p1820, %s1819, 31
        %s1822 = smul.addr %s1821, 8
        %s1823 = scalar_lea.vmem %s5, %s1822
      $region52: #{ode_block_forward.1} parent=47 // pred_fallthru
        _
    $region48: #{ode_block_forward.1} parent=5 // pred_fallthru
      _
  $region6: #{ode_block_forward.1} parent=0 // loop_footer
    %s15 = sadd.s32 1, %s11
  $region7: #{ode_block_forward.1} parent=0 // loop_footer_branch
    %10 = sbr.rel target = $region3
  $region8: #{ode_block_forward.1} parent=0 // loop_exit
    _

</llo_original>
